<compile_context>
chip_gen: v5e
topology: v5e:2x2
jax: 0.10.0
libtpu: 0.0.40
codegen_flags: <defaults>
</compile_context>

<pallas_src>
import jax
import jax.numpy as jnp
from jax.experimental import pallas as pl
from jax.experimental.pallas import tpu as pltpu


def botnet_kernel(x_ref,
                  w_in_ref, b_in_ref,
                  w_h0_ref, b_h0_ref,
                  w_h1_ref, b_h1_ref,
                  w_out_ref, b_out_ref,
                  o_ref):
    cdt = w_in_ref.dtype  # bf16 MXU operand dtype

    # Layer 1: input_layer + ReLU. x arrives f32 from HBM; cast in-kernel
    # (VPU cast hides under the MXU) instead of a wrapper-side HBM pass.
    h = jnp.dot(x_ref[...].astype(cdt), w_in_ref[...],
                preferred_element_type=jnp.float32)
    h = jnp.maximum(h + b_in_ref[...], 0.0)

    # Hidden layer 0: Linear + ReLU (+ Dropout == identity in eval mode).
    h = jnp.dot(h.astype(cdt), w_h0_ref[...], preferred_element_type=jnp.float32)
    h = jnp.maximum(h + b_h0_ref[...], 0.0)

    # Hidden layer 1: Linear + ReLU (+ Dropout == identity in eval mode).
    h = jnp.dot(h.astype(cdt), w_h1_ref[...], preferred_element_type=jnp.float32)
    h = jnp.maximum(h + b_h1_ref[...], 0.0)

    # Output layer (no activation). Output block is lane-dense (128-padded).
    out = jnp.dot(h.astype(cdt), w_out_ref[...], preferred_element_type=jnp.float32)
    o_ref[...] = (out + b_out_ref[...]).astype(o_ref.dtype)


def _round_up(n, m):
    return ((n + m - 1) // m) * m


def _pad2(a, rows, cols):
    r, c = a.shape
    return jnp.pad(a, ((0, rows - r), (0, cols - c)))


def _vmem_budget_bytes():
    """Generation-aware VMEM budget: 75% of per-core capacity (headroom for
    Mosaic scratch). Falls back to the most conservative generation (v7x)."""
    cap = 64 * 1024 * 1024
    try:
        cap = int(pltpu.get_tpu_info().vmem_capacity_bytes)
    except Exception:
        pass
    return (cap * 3) // 4


def prepare_params(params, *, compute_dtype=jnp.bfloat16):
    """Pad feature dims to MXU-friendly multiples and cast weights to the MXU
    dtype ONCE. Reuse the result across forward calls so no per-call HBM pass
    over the weights is needed."""
    in_size, hidden = params["w_in"].shape
    out_size = params["w_out"].shape[1]
    # 256-aligned hidden feeds the full 256x256 MXUs on v6e/v7x; 128 suffices
    # for v5e's 128x128 MXUs and for small hidden sizes.
    align_h = 256 if hidden > 128 else 128
    hid_p = _round_up(hidden, align_h)
    out_p = _round_up(out_size, 128)
    return dict(
        # x stays unpadded (f32) -> w_in keeps its logical K (= in_size) rows.
        w_in=_pad2(params["w_in"], in_size, hid_p).astype(compute_dtype),
        w_h0=_pad2(params["w_h0"], hid_p, hid_p).astype(compute_dtype),
        w_h1=_pad2(params["w_h1"], hid_p, hid_p).astype(compute_dtype),
        w_out=_pad2(params["w_out"], hid_p, out_p).astype(compute_dtype),
        b_in=_pad2(params["b_in"], 1, hid_p),
        b_h0=_pad2(params["b_h0"], 1, hid_p),
        b_h1=_pad2(params["b_h1"], 1, hid_p),
        b_out=_pad2(params["b_out"], 1, out_p),
        in_size=in_size,
        out_size=out_size,
    )


def botnet_forward(x, prep, *, block_batch=1024, out_dtype=jnp.float32):
    """x: [B, input_size] float32. prep: output of prepare_params().

    Returns [B, output_size] in out_dtype (f32 default; pass jnp.bfloat16 to
    halve output store traffic if the consumer tolerates it)."""
    B, in_size = x.shape
    assert in_size == prep["in_size"]
    hid_p = prep["w_in"].shape[1]
    out_p = prep["w_out"].shape[1]
    out_size = prep["out_size"]
    out_itemsize = jnp.dtype(out_dtype).itemsize

    # ---- Batch tile selection --------------------------------------------
    tm = min(_round_up(block_batch, 8), _round_up(B, 8))
    # Guarantee >= 2 batch tiles so both v7x TensorCores get work; harmless on
    # single-core v5e/v6e (one extra ~0.35us grid step).
    if B >= 16:
        tm = min(tm, _round_up(pl.cdiv(B, 2), 8))

    # ---- VMEM fit check ----------------------------------------------------
    budget = _vmem_budget_bytes()
    # Resident weight/bias footprint (worst case: 2 buffers each).
    wbytes = 2 * sum(
        int(prep[k].size) * prep[k].dtype.itemsize
        for k in ("w_in", "w_h0", "w_h1", "w_out", "b_in", "b_h0", "b_h1", "b_out"))
    # Per-batch-row bytes: double-buffered x (f32) + out tiles, plus ~4 live
    # [tm, hid_p] f32/bf16 intermediates inside the kernel.
    per_row = 2 * 4 * in_size + 2 * out_itemsize * out_p + 16 * hid_p
    avail = budget - wbytes
    if avail > per_row * 8:
        tm = min(tm, max(8, (avail // per_row) // 8 * 8))

    grid_b = pl.cdiv(B, tm)
    B_p = grid_b * tm
    # Only pad the batch when B is not a multiple of tm (avoids an extra HBM
    # pass over x in the common aligned case).
    x_in = x if B_p == B else jnp.pad(x, ((0, B_p - B), (0, 0)))

    def run(single_buffer_weights):
        def resident(a):
            # Full-array block + constant index_map: fetched once, reused on
            # every batch tile. Single-buffering halves its VMEM footprint.
            nd = a.ndim
            kw = {}
            if single_buffer_weights:
                kw["pipeline_mode"] = pl.Buffered(1)
            return pl.BlockSpec(a.shape, lambda i: (0,) * nd, **kw)

        return pl.pallas_call(
            botnet_kernel,
            out_shape=jax.ShapeDtypeStruct((B_p, out_p), out_dtype),
            grid_spec=pltpu.PrefetchScalarGridSpec(
                num_scalar_prefetch=0,
                grid=(grid_b,),
                in_specs=[
                    pl.BlockSpec((tm, in_size), lambda i: (i, 0)),  # x streamed
                    resident(prep["w_in"]), resident(prep["b_in"]),
                    resident(prep["w_h0"]), resident(prep["b_h0"]),
                    resident(prep["w_h1"]), resident(prep["b_h1"]),
                    resident(prep["w_out"]), resident(prep["b_out"]),
                ],
                out_specs=pl.BlockSpec((tm, out_p), lambda i: (i, 0)),
            ),
            compiler_params=pltpu.CompilerParams(
                # Independent batch tiles -> megacore-parallel on v7x.
                dimension_semantics=("parallel",),
                vmem_limit_bytes=int(budget),
            ),
        )(x_in, prep["w_in"], prep["b_in"], prep["w_h0"], prep["b_h0"],
          prep["w_h1"], prep["b_h1"], prep["w_out"], prep["b_out"])

    try:
        out_padded = run(True)
    except Exception:
        # pipeline_mode=pl.Buffered(1) unsupported on this jax build ->
        # fall back to default double-buffered resident weights.
        out_padded = run(False)

    if B_p == B and out_p == out_size:
        return out_padded  # no trailing slice/copy in the aligned case
    return out_padded[:B, :out_size]


def init_params(key, input_size, hidden_size, output_size):
    """Deterministic init mimicking nn.Linear: U(-1/sqrt(fan_in), 1/sqrt(fan_in))."""
    def linear(k, fan_in, fan_out):
        kw, kb = jax.random.split(k)
        bound = 1.0 / jnp.sqrt(fan_in)
        w = jax.random.uniform(kw, (fan_in, fan_out), jnp.float32, -bound, bound)
        b = jax.random.uniform(kb, (1, fan_out), jnp.float32, -bound, bound)
        return w, b

    k0, k1, k2, k3 = jax.random.split(key, 4)
    w_in, b_in = linear(k0, input_size, hidden_size)
    w_h0, b_h0 = linear(k1, hidden_size, hidden_size)
    w_h1, b_h1 = linear(k2, hidden_size, hidden_size)
    w_out, b_out = linear(k3, hidden_size, output_size)
    return dict(w_in=w_in, b_in=b_in, w_h0=w_h0, b_h0=b_h0,
                w_h1=w_h1, b_h1=b_h1, w_out=w_out, b_out=b_out)


def botnet_reference(x, p, compute_dtype=jnp.float32):
    """Pure-JAX reference. compute_dtype=bf16 mirrors the kernel's operand
    quantization (f32 math on bf16-rounded operands)."""
    def q(a):
        return a.astype(compute_dtype).astype(jnp.float32)

    prec = jax.lax.Precision.HIGHEST
    h = jnp.maximum(jnp.dot(q(x), q(p["w_in"]), precision=prec) + p["b_in"], 0.0)
    h = jnp.maximum(jnp.dot(q(h), q(p["w_h0"]), precision=prec) + p["b_h0"], 0.0)
    h = jnp.maximum(jnp.dot(q(h), q(p["w_h1"]), precision=prec) + p["b_h1"], 0.0)
    return jnp.dot(q(h), q(p["w_out"]), precision=prec) + p["b_out"]


if __name__ == "__main__":
    input_size, hidden_size, output_size = 16, 32, 8
    batch = 64

    key = jax.random.PRNGKey(0)
    kx, kp = jax.random.split(key)
    x = jax.random.normal(kx, (batch, input_size), jnp.float32)
    params = init_params(kp, input_size, hidden_size, output_size)

    # One-time weight prep (pad + bf16 cast), reused across forward calls.
    prep = prepare_params(params)

    # block_batch=16 -> grid=(4,) so the streamed-x / resident-weight pipeline
    # and the parallel batch axis are actually exercised at this small size.
    out = botnet_forward(x, prep, block_batch=16)
    out = jax.block_until_ready(out)

    ref = botnet_reference(x, params, compute_dtype=jnp.bfloat16)
    assert out.shape == (batch, output_size)
    assert jnp.allclose(out, ref, atol=2e-2, rtol=2e-2), \
        float(jnp.max(jnp.abs(out - ref)))

    print("KERNEL_OK")
</pallas_src>

<mosaic_0001>
module attributes {stable_mosaic.version = 11 : i64} {
  func.func @botnet_kernel(%arg0: i32, %arg1: memref<16x16xf32, #tpu.memory_space<vmem>>, %arg2: memref<16x128xbf16, #tpu.memory_space<vmem>>, %arg3: memref<1x128xf32, #tpu.memory_space<vmem>>, %arg4: memref<128x128xbf16, #tpu.memory_space<vmem>>, %arg5: memref<1x128xf32, #tpu.memory_space<vmem>>, %arg6: memref<128x128xbf16, #tpu.memory_space<vmem>>, %arg7: memref<1x128xf32, #tpu.memory_space<vmem>>, %arg8: memref<128x128xbf16, #tpu.memory_space<vmem>>, %arg9: memref<1x128xf32, #tpu.memory_space<vmem>>, %arg10: memref<16x128xf32, #tpu.memory_space<vmem>>) attributes {dimension_semantics = [#tpu.dimension_semantics<parallel>], iteration_bounds = array<i64: 4>, scalar_prefetch = 0 : i64, scratch_operands = 0 : i64, tpu.core_type = #tpu.core_type<tc>, window_params = [{transform_indices = @transform_0, window_bounds = array<i64: 16, 16>}, {pipeline_mode = #tpu.pipeline_mode<synchronous>, transform_indices = @transform_1, window_bounds = array<i64: 16, 128>}, {pipeline_mode = #tpu.pipeline_mode<synchronous>, transform_indices = @transform_2, window_bounds = array<i64: 1, 128>}, {pipeline_mode = #tpu.pipeline_mode<synchronous>, transform_indices = @transform_3, window_bounds = array<i64: 128, 128>}, {pipeline_mode = #tpu.pipeline_mode<synchronous>, transform_indices = @transform_4, window_bounds = array<i64: 1, 128>}, {pipeline_mode = #tpu.pipeline_mode<synchronous>, transform_indices = @transform_5, window_bounds = array<i64: 128, 128>}, {pipeline_mode = #tpu.pipeline_mode<synchronous>, transform_indices = @transform_6, window_bounds = array<i64: 1, 128>}, {pipeline_mode = #tpu.pipeline_mode<synchronous>, transform_indices = @transform_7, window_bounds = array<i64: 128, 128>}, {pipeline_mode = #tpu.pipeline_mode<synchronous>, transform_indices = @transform_8, window_bounds = array<i64: 1, 128>}, {transform_indices = @transform_9, window_bounds = array<i64: 16, 128>}]} {
    %c0 = arith.constant 0 : index
    %c0_0 = arith.constant 0 : index
    %0 = vector.load %arg1[%c0, %c0_0] : memref<16x16xf32, #tpu.memory_space<vmem>>, vector<16x16xf32>
    %1 = arith.truncf %0 : vector<16x16xf32> to vector<16x16xbf16>
    %c0_1 = arith.constant 0 : index
    %c0_2 = arith.constant 0 : index
    %2 = vector.load %arg2[%c0_1, %c0_2] : memref<16x128xbf16, #tpu.memory_space<vmem>>, vector<16x128xbf16>
    %cst = arith.constant dense<0.000000e+00> : vector<16x128xf32>
    %3 = tpu.matmul %1, %2, %cst {dimension_numbers = #tpu.dot_dimension_numbers<[1], [0], [0], [1], [0, 0, 1, 1], [], []>} : vector<16x16xbf16>, vector<16x128xbf16>, vector<16x128xf32> -> vector<16x128xf32>
    %c0_3 = arith.constant 0 : index
    %c0_4 = arith.constant 0 : index
    %4 = vector.load %arg3[%c0_3, %c0_4] : memref<1x128xf32, #tpu.memory_space<vmem>>, vector<1x128xf32>
    %5 = vector.broadcast %4 : vector<1x128xf32> to vector<16x128xf32>
    %6 = arith.addf %3, %5 : vector<16x128xf32>
    %cst_5 = arith.constant 0.000000e+00 : f32
    %7 = vector.broadcast %cst_5 : f32 to vector<16x128xf32>
    %8 = arith.maximumf %6, %7 : vector<16x128xf32>
    %9 = arith.truncf %8 : vector<16x128xf32> to vector<16x128xbf16>
    %c0_6 = arith.constant 0 : index
    %c0_7 = arith.constant 0 : index
    %10 = vector.load %arg4[%c0_6, %c0_7] : memref<128x128xbf16, #tpu.memory_space<vmem>>, vector<128x128xbf16>
    %cst_8 = arith.constant dense<0.000000e+00> : vector<16x128xf32>
    %11 = tpu.matmul %9, %10, %cst_8 {dimension_numbers = #tpu.dot_dimension_numbers<[1], [0], [0], [1], [0, 0, 1, 1], [], []>} : vector<16x128xbf16>, vector<128x128xbf16>, vector<16x128xf32> -> vector<16x128xf32>
    %c0_9 = arith.constant 0 : index
    %c0_10 = arith.constant 0 : index
    %12 = vector.load %arg5[%c0_9, %c0_10] : memref<1x128xf32, #tpu.memory_space<vmem>>, vector<1x128xf32>
    %13 = vector.broadcast %12 : vector<1x128xf32> to vector<16x128xf32>
    %14 = arith.addf %11, %13 : vector<16x128xf32>
    %cst_11 = arith.constant 0.000000e+00 : f32
    %15 = vector.broadcast %cst_11 : f32 to vector<16x128xf32>
    %16 = arith.maximumf %14, %15 : vector<16x128xf32>
    %17 = arith.truncf %16 : vector<16x128xf32> to vector<16x128xbf16>
    %c0_12 = arith.constant 0 : index
    %c0_13 = arith.constant 0 : index
    %18 = vector.load %arg6[%c0_12, %c0_13] : memref<128x128xbf16, #tpu.memory_space<vmem>>, vector<128x128xbf16>
    %cst_14 = arith.constant dense<0.000000e+00> : vector<16x128xf32>
    %19 = tpu.matmul %17, %18, %cst_14 {dimension_numbers = #tpu.dot_dimension_numbers<[1], [0], [0], [1], [0, 0, 1, 1], [], []>} : vector<16x128xbf16>, vector<128x128xbf16>, vector<16x128xf32> -> vector<16x128xf32>
    %c0_15 = arith.constant 0 : index
    %c0_16 = arith.constant 0 : index
    %20 = vector.load %arg7[%c0_15, %c0_16] : memref<1x128xf32, #tpu.memory_space<vmem>>, vector<1x128xf32>
    %21 = vector.broadcast %20 : vector<1x128xf32> to vector<16x128xf32>
    %22 = arith.addf %19, %21 : vector<16x128xf32>
    %cst_17 = arith.constant 0.000000e+00 : f32
    %23 = vector.broadcast %cst_17 : f32 to vector<16x128xf32>
    %24 = arith.maximumf %22, %23 : vector<16x128xf32>
    %25 = arith.truncf %24 : vector<16x128xf32> to vector<16x128xbf16>
    %c0_18 = arith.constant 0 : index
    %c0_19 = arith.constant 0 : index
    %26 = vector.load %arg8[%c0_18, %c0_19] : memref<128x128xbf16, #tpu.memory_space<vmem>>, vector<128x128xbf16>
    %cst_20 = arith.constant dense<0.000000e+00> : vector<16x128xf32>
    %27 = tpu.matmul %25, %26, %cst_20 {dimension_numbers = #tpu.dot_dimension_numbers<[1], [0], [0], [1], [0, 0, 1, 1], [], []>} : vector<16x128xbf16>, vector<128x128xbf16>, vector<16x128xf32> -> vector<16x128xf32>
    %c0_21 = arith.constant 0 : index
    %c0_22 = arith.constant 0 : index
    %28 = vector.load %arg9[%c0_21, %c0_22] : memref<1x128xf32, #tpu.memory_space<vmem>>, vector<1x128xf32>
    %29 = vector.broadcast %28 : vector<1x128xf32> to vector<16x128xf32>
    %30 = arith.addf %27, %29 : vector<16x128xf32>
    %c0_23 = arith.constant 0 : index
    %c0_24 = arith.constant 0 : index
    %31 = vector.load %arg10[%c0_23, %c0_24] : memref<16x128xf32, #tpu.memory_space<vmem>>, vector<16x128xf32>
    tpu.vector_store %arg10[%c0_23, %c0_24], %30 {strides = array<i32>} : memref<16x128xf32, #tpu.memory_space<vmem>>, vector<16x128xf32>,
    return
  }
  func.func @transform_0(%arg0: i32) -> (i32, i32) {
    %c0_i32 = arith.constant 0 : i32
    %c0_i32_0 = arith.constant 0 : i32
    return %arg0, %c0_i32 : i32, i32
  }
  func.func @transform_1(%arg0: i32) -> (i32, i32) {
    %c0_i32 = arith.constant 0 : i32
    %c0_i32_0 = arith.constant 0 : i32
    %c0_i32_1 = arith.constant 0 : i32
    return %c0_i32, %c0_i32_0 : i32, i32
  }
  func.func @transform_2(%arg0: i32) -> (i32, i32) {
    %c0_i32 = arith.constant 0 : i32
    %c0_i32_0 = arith.constant 0 : i32
    %c0_i32_1 = arith.constant 0 : i32
    return %c0_i32, %c0_i32_0 : i32, i32
  }
  func.func @transform_3(%arg0: i32) -> (i32, i32) {
    %c0_i32 = arith.constant 0 : i32
    %c0_i32_0 = arith.constant 0 : i32
    %c0_i32_1 = arith.constant 0 : i32
    return %c0_i32, %c0_i32_0 : i32, i32
  }
  func.func @transform_4(%arg0: i32) -> (i32, i32) {
    %c0_i32 = arith.constant 0 : i32
    %c0_i32_0 = arith.constant 0 : i32
    %c0_i32_1 = arith.constant 0 : i32
    return %c0_i32, %c0_i32_0 : i32, i32
  }
  func.func @transform_5(%arg0: i32) -> (i32, i32) {
    %c0_i32 = arith.constant 0 : i32
    %c0_i32_0 = arith.constant 0 : i32
    %c0_i32_1 = arith.constant 0 : i32
    return %c0_i32, %c0_i32_0 : i32, i32
  }
  func.func @transform_6(%arg0: i32) -> (i32, i32) {
    %c0_i32 = arith.constant 0 : i32
    %c0_i32_0 = arith.constant 0 : i32
    %c0_i32_1 = arith.constant 0 : i32
    return %c0_i32, %c0_i32_0 : i32, i32
  }
  func.func @transform_7(%arg0: i32) -> (i32, i32) {
    %c0_i32 = arith.constant 0 : i32
    %c0_i32_0 = arith.constant 0 : i32
    %c0_i32_1 = arith.constant 0 : i32
    return %c0_i32, %c0_i32_0 : i32, i32
  }
  func.func @transform_8(%arg0: i32) -> (i32, i32) {
    %c0_i32 = arith.constant 0 : i32
    %c0_i32_0 = arith.constant 0 : i32
    %c0_i32_1 = arith.constant 0 : i32
    return %c0_i32, %c0_i32_0 : i32, i32
  }
  func.func @transform_9(%arg0: i32) -> (i32, i32) {
    %c0_i32 = arith.constant 0 : i32
    %c0_i32_0 = arith.constant 0 : i32
    return %arg0, %c0_i32 : i32, i32
  }
}

module attributes {stable_mosaic.version = 11 : i64} {
  func.func @botnet_kernel(%arg0: i32, %arg1: memref<16x16xf32, #tpu.memory_space<vmem>>, %arg2: memref<16x128xbf16, #tpu.memory_space<vmem>>, %arg3: memref<1x128xf32, #tpu.memory_space<vmem>>, %arg4: memref<128x128xbf16, #tpu.memory_space<vmem>>, %arg5: memref<1x128xf32, #tpu.memory_space<vmem>>, %arg6: memref<128x128xbf16, #tpu.memory_space<vmem>>, %arg7: memref<1x128xf32, #tpu.memory_space<vmem>>, %arg8: memref<128x128xbf16, #tpu.memory_space<vmem>>, %arg9: memref<1x128xf32, #tpu.memory_space<vmem>>, %arg10: memref<16x128xf32, #tpu.memory_space<vmem>>) attributes {dimension_semantics = [#tpu.dimension_semantics<parallel>], iteration_bounds = array<i64: 4>, scalar_prefetch = 0 : i64, scratch_operands = 0 : i64, tpu.core_type = #tpu.core_type<tc>, window_params = [{transform_indices = @transform_0, window_bounds = array<i64: 16, 16>}, {pipeline_mode = #tpu.pipeline_mode<synchronous>, transform_indices = @transform_1, window_bounds = array<i64: 16, 128>}, {pipeline_mode = #tpu.pipeline_mode<synchronous>, transform_indices = @transform_2, window_bounds = array<i64: 1, 128>}, {pipeline_mode = #tpu.pipeline_mode<synchronous>, transform_indices = @transform_3, window_bounds = array<i64: 128, 128>}, {pipeline_mode = #tpu.pipeline_mode<synchronous>, transform_indices = @transform_4, window_bounds = array<i64: 1, 128>}, {pipeline_mode = #tpu.pipeline_mode<synchronous>, transform_indices = @transform_5, window_bounds = array<i64: 128, 128>}, {pipeline_mode = #tpu.pipeline_mode<synchronous>, transform_indices = @transform_6, window_bounds = array<i64: 1, 128>}, {pipeline_mode = #tpu.pipeline_mode<synchronous>, transform_indices = @transform_7, window_bounds = array<i64: 128, 128>}, {pipeline_mode = #tpu.pipeline_mode<synchronous>, transform_indices = @transform_8, window_bounds = array<i64: 1, 128>}, {transform_indices = @transform_9, window_bounds = array<i64: 16, 128>}]} {
    %c0 = arith.constant 0 : index
    %c0_0 = arith.constant 0 : index
    %0 = vector.load %arg1[%c0, %c0_0] : memref<16x16xf32, #tpu.memory_space<vmem>>, vector<16x16xf32>
    %1 = arith.truncf %0 : vector<16x16xf32> to vector<16x16xbf16>
    %c0_1 = arith.constant 0 : index
    %c0_2 = arith.constant 0 : index
    %2 = vector.load %arg2[%c0_1, %c0_2] : memref<16x128xbf16, #tpu.memory_space<vmem>>, vector<16x128xbf16>
    %cst = arith.constant dense<0.000000e+00> : vector<16x128xf32>
    %3 = tpu.matmul %1, %2, %cst {dimension_numbers = #tpu.dot_dimension_numbers<[1], [0], [0], [1], [0, 0, 1, 1], [], []>} : vector<16x16xbf16>, vector<16x128xbf16>, vector<16x128xf32> -> vector<16x128xf32>
    %c0_3 = arith.constant 0 : index
    %c0_4 = arith.constant 0 : index
    %4 = vector.load %arg3[%c0_3, %c0_4] : memref<1x128xf32, #tpu.memory_space<vmem>>, vector<1x128xf32>
    %5 = vector.broadcast %4 : vector<1x128xf32> to vector<16x128xf32>
    %6 = arith.addf %3, %5 : vector<16x128xf32>
    %cst_5 = arith.constant 0.000000e+00 : f32
    %7 = vector.broadcast %cst_5 : f32 to vector<16x128xf32>
    %8 = arith.maximumf %6, %7 : vector<16x128xf32>
    %9 = arith.truncf %8 : vector<16x128xf32> to vector<16x128xbf16>
    %c0_6 = arith.constant 0 : index
    %c0_7 = arith.constant 0 : index
    %10 = vector.load %arg4[%c0_6, %c0_7] : memref<128x128xbf16, #tpu.memory_space<vmem>>, vector<128x128xbf16>
    %cst_8 = arith.constant dense<0.000000e+00> : vector<16x128xf32>
    %11 = tpu.matmul %9, %10, %cst_8 {dimension_numbers = #tpu.dot_dimension_numbers<[1], [0], [0], [1], [0, 0, 1, 1], [], []>} : vector<16x128xbf16>, vector<128x128xbf16>, vector<16x128xf32> -> vector<16x128xf32>
    %c0_9 = arith.constant 0 : index
    %c0_10 = arith.constant 0 : index
    %12 = vector.load %arg5[%c0_9, %c0_10] : memref<1x128xf32, #tpu.memory_space<vmem>>, vector<1x128xf32>
    %13 = vector.broadcast %12 : vector<1x128xf32> to vector<16x128xf32>
    %14 = arith.addf %11, %13 : vector<16x128xf32>
    %cst_11 = arith.constant 0.000000e+00 : f32
    %15 = vector.broadcast %cst_11 : f32 to vector<16x128xf32>
    %16 = arith.maximumf %14, %15 : vector<16x128xf32>
    %17 = arith.truncf %16 : vector<16x128xf32> to vector<16x128xbf16>
    %c0_12 = arith.constant 0 : index
    %c0_13 = arith.constant 0 : index
    %18 = vector.load %arg6[%c0_12, %c0_13] : memref<128x128xbf16, #tpu.memory_space<vmem>>, vector<128x128xbf16>
    %cst_14 = arith.constant dense<0.000000e+00> : vector<16x128xf32>
    %19 = tpu.matmul %17, %18, %cst_14 {dimension_numbers = #tpu.dot_dimension_numbers<[1], [0], [0], [1], [0, 0, 1, 1], [], []>} : vector<16x128xbf16>, vector<128x128xbf16>, vector<16x128xf32> -> vector<16x128xf32>
    %c0_15 = arith.constant 0 : index
    %c0_16 = arith.constant 0 : index
    %20 = vector.load %arg7[%c0_15, %c0_16] : memref<1x128xf32, #tpu.memory_space<vmem>>, vector<1x128xf32>
    %21 = vector.broadcast %20 : vector<1x128xf32> to vector<16x128xf32>
    %22 = arith.addf %19, %21 : vector<16x128xf32>
    %cst_17 = arith.constant 0.000000e+00 : f32
    %23 = vector.broadcast %cst_17 : f32 to vector<16x128xf32>
    %24 = arith.maximumf %22, %23 : vector<16x128xf32>
    %25 = arith.truncf %24 : vector<16x128xf32> to vector<16x128xbf16>
    %c0_18 = arith.constant 0 : index
    %c0_19 = arith.constant 0 : index
    %26 = vector.load %arg8[%c0_18, %c0_19] : memref<128x128xbf16, #tpu.memory_space<vmem>>, vector<128x128xbf16>
    %cst_20 = arith.constant dense<0.000000e+00> : vector<16x128xf32>
    %27 = tpu.matmul %25, %26, %cst_20 {dimension_numbers = #tpu.dot_dimension_numbers<[1], [0], [0], [1], [0, 0, 1, 1], [], []>} : vector<16x128xbf16>, vector<128x128xbf16>, vector<16x128xf32> -> vector<16x128xf32>
    %c0_21 = arith.constant 0 : index
    %c0_22 = arith.constant 0 : index
    %28 = vector.load %arg9[%c0_21, %c0_22] : memref<1x128xf32, #tpu.memory_space<vmem>>, vector<1x128xf32>
    %29 = vector.broadcast %28 : vector<1x128xf32> to vector<16x128xf32>
    %30 = arith.addf %27, %29 : vector<16x128xf32>
    %c0_23 = arith.constant 0 : index
    %c0_24 = arith.constant 0 : index
    %31 = vector.load %arg10[%c0_23, %c0_24] : memref<16x128xf32, #tpu.memory_space<vmem>>, vector<16x128xf32>
    tpu.vector_store %arg10[%c0_23, %c0_24], %30 {strides = array<i32>} : memref<16x128xf32, #tpu.memory_space<vmem>>, vector<16x128xf32>,
    return
  }
  func.func @transform_0(%arg0: i32) -> (i32, i32) {
    %c0_i32 = arith.constant 0 : i32
    %c0_i32_0 = arith.constant 0 : i32
    return %arg0, %c0_i32 : i32, i32
  }
  func.func @transform_1(%arg0: i32) -> (i32, i32) {
    %c0_i32 = arith.constant 0 : i32
    %c0_i32_0 = arith.constant 0 : i32
    %c0_i32_1 = arith.constant 0 : i32
    return %c0_i32, %c0_i32_0 : i32, i32
  }
  func.func @transform_2(%arg0: i32) -> (i32, i32) {
    %c0_i32 = arith.constant 0 : i32
    %c0_i32_0 = arith.constant 0 : i32
    %c0_i32_1 = arith.constant 0 : i32
    return %c0_i32, %c0_i32_0 : i32, i32
  }
  func.func @transform_3(%arg0: i32) -> (i32, i32) {
    %c0_i32 = arith.constant 0 : i32
    %c0_i32_0 = arith.constant 0 : i32
    %c0_i32_1 = arith.constant 0 : i32
    return %c0_i32, %c0_i32_0 : i32, i32
  }
  func.func @transform_4(%arg0: i32) -> (i32, i32) {
    %c0_i32 = arith.constant 0 : i32
    %c0_i32_0 = arith.constant 0 : i32
    %c0_i32_1 = arith.constant 0 : i32
    return %c0_i32, %c0_i32_0 : i32, i32
  }
  func.func @transform_5(%arg0: i32) -> (i32, i32) {
    %c0_i32 = arith.constant 0 : i32
    %c0_i32_0 = arith.constant 0 : i32
    %c0_i32_1 = arith.constant 0 : i32
    return %c0_i32, %c0_i32_0 : i32, i32
  }
  func.func @transform_6(%arg0: i32) -> (i32, i32) {
    %c0_i32 = arith.constant 0 : i32
    %c0_i32_0 = arith.constant 0 : i32
    %c0_i32_1 = arith.constant 0 : i32
    return %c0_i32, %c0_i32_0 : i32, i32
  }
  func.func @transform_7(%arg0: i32) -> (i32, i32) {
    %c0_i32 = arith.constant 0 : i32
    %c0_i32_0 = arith.constant 0 : i32
    %c0_i32_1 = arith.constant 0 : i32
    return %c0_i32, %c0_i32_0 : i32, i32
  }
  func.func @transform_8(%arg0: i32) -> (i32, i32) {
    %c0_i32 = arith.constant 0 : i32
    %c0_i32_0 = arith.constant 0 : i32
    %c0_i32_1 = arith.constant 0 : i32
    return %c0_i32, %c0_i32_0 : i32, i32
  }
  func.func @transform_9(%arg0: i32) -> (i32, i32) {
    %c0_i32 = arith.constant 0 : i32
    %c0_i32_0 = arith.constant 0 : i32
    return %arg0, %c0_i32 : i32, i32
  }
}

</mosaic_0001>

<llo_original>
// kernel: tpu_custom_call.1
$region0: #{tpu_custom_call.1}
  #allocation0 [shape = 'u32[]', space=smem, size = 0x4, offset = 0x4, fixed_abs, tag = 'smem constant byte address 0x4 - core index']
  #allocation1 [shape = 'u32[72,128]{1,0:T(1,128)}', space=vmem, size = 0x9000, scoped, tag = 'internal scratch']
  %s0 = inlined_call_operand.vmem [shape: f32[64,16], index: 0, kind: input, shape index: {}]
  %s1 = inlined_call_operand.vmem [shape: bf16[16,128], index: 1, kind: input, shape index: {}]
  %s2 = inlined_call_operand.vmem [shape: f32[1,128], index: 2, kind: input, shape index: {}]
  %s3 = inlined_call_operand.vmem [shape: bf16[128,128], index: 3, kind: input, shape index: {}]
  %s4 = inlined_call_operand.vmem [shape: f32[1,128], index: 4, kind: input, shape index: {}]
  %s5 = inlined_call_operand.hbm [shape: bf16[128,128], index: 5, kind: input, shape index: {}]
  %s6 = inlined_call_operand.vmem [shape: f32[1,128], index: 6, kind: input, shape index: {}]
  %s7 = inlined_call_operand.hbm [shape: bf16[128,128], index: 7, kind: input, shape index: {}]
  %s8 = inlined_call_operand.vmem [shape: f32[1,128], index: 8, kind: input, shape index: {}]
  %s9 = inlined_call_operand.hbm [shape: f32[64,128], index: 9, kind: output, shape index: {}]
  %s10 = sld [smem:[#allocation0]]
  $region77: #{tpu_custom_call.1} parent=0
    _
  %s12 = ssub.s32 1, %s10
  %s13 = scalar_select 0, %s12, %s10
  $region1: #{tpu_custom_call.1} parent=0
    #allocation2 [shape = 'u8[32768]{0}', space=vmem, size = 0x8000, scoped, tag = 'input window, operand 5, single buffered']
    #allocation3 [shape = 's32[2]{0}', space=sflag, size = 0x8, scoped, tag = 'scoped memory for tpu_custom_call.1']
    #allocation4 [shape = 's32[2]{0}', space=sflag, size = 0x8, scoped, tag = 'scoped memory for tpu_custom_call.1']
    #allocation5 [shape = 'u8[32768]{0}', space=vmem, size = 0x8000, scoped, tag = 'input window, operand 7, single buffered']
    #allocation6 [shape = 's32[1]{0}', space=sflag, size = 0x4, scoped, tag = 'scoped memory for tpu_custom_call.1']
    #allocation7 [shape = 'u8[16384]{0}', space=vmem, size = 0x4000, scoped, tag = 'output window, operand 0']
    %14 = vsyncpa [#allocation3], 0
    %15 = vsyncpa [#allocation6], 0
    %16 = vsyncpa [#allocation4], 0
    %s17 = scalar_lea.sflag [#allocation4], 1
    %18 = vsyncpa %s17, 0
    loop: start=0, step=1, limit=6
    $region2: #{tpu_custom_call.1} parent=1 // loop_pre_header
      _
    $region3: #{tpu_custom_call.1} parent=1 // loop_header
      %s20 = sphi 0, %s24
      %p21 = scmp.ge.s32.totalorder %s20, 6
      %s30 = sphi 0, %s32
      %s33 = sphi 0, %s30
      %s34 = sphi 0, %s33
      %s50 = sphi 0, %s34
      %s54 = sphi 0, %s54
      %s56 = sphi 0, %s54
      %s57 = sphi 0, %s56
      %s71 = sphi 0, %s57
      %s75 = sphi 0, %s75
      %s77 = sphi 0, %s75
      %s78 = sphi 0, %s77
      %s92 = sphi 0, %s78
      %s96 = sphi 0, %s96
      %s98 = sphi 0, %s96
      %s99 = sphi 0, %s98
      %s113 = sphi 0, %s99
      %s117 = sphi 0, %s117
      %s119 = sphi 0, %s117
      %s120 = sphi 0, %s119
      %s134 = sphi 0, %s120
      %s138 = sphi 0, %s138
      %s140 = sphi 0, %s138
      %s141 = sphi 0, %s140
      %s155 = sphi 0, %s141
      %s159 = sphi 0, %s159
      %s161 = sphi 0, %s159
      %s162 = sphi 0, %s161
      %s176 = sphi 0, %s162
      %s180 = sphi 0, %s180
      %s182 = sphi 0, %s180
      %s183 = sphi 0, %s182
      %s197 = sphi 0, %s183
      %s201 = sphi 0, %s201
      %s203 = sphi 0, %s201
      %s204 = sphi 0, %s203
      %s218 = sphi 0, %s204
      %s224 = sphi 0, %s226
      %s227 = sphi 0, %s224
      %s228 = sphi 0, %s227
      %s244 = sphi 0, %s228
    $region4: #{tpu_custom_call.1} parent=1 // loop_header_branch
      %23 = sbr.rel (%p21) target = $region8
    $region5: #{tpu_custom_call.1} parent=1 // loop_body
      %s25 = ssub.s32 %s20, 1
      %s26 = ssub.s32 %s20, 2
      %s27 = sadd.s32 %s20, 1
      %s28 = ssub.s32 %s20, %s27
      %p29 = scmp.eq.s32.totalorder %s28, 0
      %s31 = sadd.s32 %s30, 1
      %s32 = scalar_select %p29, %s30, %s31
      %p35 = pneg %p29
      %p36 = scmp.eq.s32.totalorder %s20, 3
      %p37 = por %p35, %p36
      %p38 = scmp.ne.s32.totalorder %s30, %s33
      %p39 = scmp.eq.s32.totalorder %s20, 0
      %p40 = por %p38, %p39
      %p41 = scmp.ne.s32.totalorder %s30, %s33
      %p42 = scmp.eq.s32.totalorder %s25, 3
      %p43 = por %p41, %p42
      %p44 = scmp.ne.s32.totalorder %s33, %s34
      %p45 = scmp.eq.s32.totalorder %s25, 0
      %p46 = por %p44, %p45
      %p47 = scmp.ne.s32.totalorder %s33, %s34
      %p48 = scmp.eq.s32.totalorder %s26, 3
      %p49 = por %p47, %p48
      %p51 = scmp.ne.s32.totalorder %s34, %s50
      %p52 = scmp.eq.s32.totalorder %s26, 0
      %p53 = por %p51, %p52
      %s55 = sadd.s32 %s54, 1
      %p58 = scmp.eq.s32.totalorder %s20, 3
      %p59 = scmp.ne.s32.totalorder %s54, %s56
      %p60 = scmp.eq.s32.totalorder %s20, 0
      %p61 = por %p59, %p60
      %p62 = scmp.ne.s32.totalorder %s54, %s56
      %p63 = scmp.eq.s32.totalorder %s25, 3
      %p64 = por %p62, %p63
      %p65 = scmp.ne.s32.totalorder %s56, %s57
      %p66 = scmp.eq.s32.totalorder %s25, 0
      %p67 = por %p65, %p66
      %p68 = scmp.ne.s32.totalorder %s56, %s57
      %p69 = scmp.eq.s32.totalorder %s26, 3
      %p70 = por %p68, %p69
      %p72 = scmp.ne.s32.totalorder %s57, %s71
      %p73 = scmp.eq.s32.totalorder %s26, 0
      %p74 = por %p72, %p73
      %s76 = sadd.s32 %s75, 1
      %p79 = scmp.eq.s32.totalorder %s20, 3
      %p80 = scmp.ne.s32.totalorder %s75, %s77
      %p81 = scmp.eq.s32.totalorder %s20, 0
      %p82 = por %p80, %p81
      %p83 = scmp.ne.s32.totalorder %s75, %s77
      %p84 = scmp.eq.s32.totalorder %s25, 3
      %p85 = por %p83, %p84
      %p86 = scmp.ne.s32.totalorder %s77, %s78
      %p87 = scmp.eq.s32.totalorder %s25, 0
      %p88 = por %p86, %p87
      %p89 = scmp.ne.s32.totalorder %s77, %s78
      %p90 = scmp.eq.s32.totalorder %s26, 3
      %p91 = por %p89, %p90
      %p93 = scmp.ne.s32.totalorder %s78, %s92
      %p94 = scmp.eq.s32.totalorder %s26, 0
      %p95 = por %p93, %p94
      %s97 = sadd.s32 %s96, 1
      %p100 = scmp.eq.s32.totalorder %s20, 3
      %p101 = scmp.ne.s32.totalorder %s96, %s98
      %p102 = scmp.eq.s32.totalorder %s20, 0
      %p103 = por %p101, %p102
      %p104 = scmp.ne.s32.totalorder %s96, %s98
      %p105 = scmp.eq.s32.totalorder %s25, 3
      %p106 = por %p104, %p105
      %p107 = scmp.ne.s32.totalorder %s98, %s99
      %p108 = scmp.eq.s32.totalorder %s25, 0
      %p109 = por %p107, %p108
      %p110 = scmp.ne.s32.totalorder %s98, %s99
      %p111 = scmp.eq.s32.totalorder %s26, 3
      %p112 = por %p110, %p111
      %p114 = scmp.ne.s32.totalorder %s99, %s113
      %p115 = scmp.eq.s32.totalorder %s26, 0
      %p116 = por %p114, %p115
      %s118 = sadd.s32 %s117, 1
      %p121 = scmp.eq.s32.totalorder %s20, 3
      %p122 = scmp.ne.s32.totalorder %s117, %s119
      %p123 = scmp.eq.s32.totalorder %s20, 0
      %p124 = por %p122, %p123
      %p125 = scmp.ne.s32.totalorder %s117, %s119
      %p126 = scmp.eq.s32.totalorder %s25, 3
      %p127 = por %p125, %p126
      %p128 = scmp.ne.s32.totalorder %s119, %s120
      %p129 = scmp.eq.s32.totalorder %s25, 0
      %p130 = por %p128, %p129
      %p131 = scmp.ne.s32.totalorder %s119, %s120
      %p132 = scmp.eq.s32.totalorder %s26, 3
      %p133 = por %p131, %p132
      %p135 = scmp.ne.s32.totalorder %s120, %s134
      %p136 = scmp.eq.s32.totalorder %s26, 0
      %p137 = por %p135, %p136
      %s139 = sadd.s32 %s138, 1
      %p142 = scmp.eq.s32.totalorder %s20, 3
      %p143 = scmp.ne.s32.totalorder %s138, %s140
      %p144 = scmp.eq.s32.totalorder %s20, 0
      %p145 = por %p143, %p144
      %p146 = scmp.ne.s32.totalorder %s138, %s140
      %p147 = scmp.eq.s32.totalorder %s25, 3
      %p148 = por %p146, %p147
      %p149 = scmp.ne.s32.totalorder %s140, %s141
      %p150 = scmp.eq.s32.totalorder %s25, 0
      %p151 = por %p149, %p150
      %p152 = scmp.ne.s32.totalorder %s140, %s141
      %p153 = scmp.eq.s32.totalorder %s26, 3
      %p154 = por %p152, %p153
      %p156 = scmp.ne.s32.totalorder %s141, %s155
      %p157 = scmp.eq.s32.totalorder %s26, 0
      %p158 = por %p156, %p157
      %s160 = sadd.s32 %s159, 1
      %p163 = scmp.eq.s32.totalorder %s20, 3
      %p164 = scmp.ne.s32.totalorder %s159, %s161
      %p165 = scmp.eq.s32.totalorder %s20, 0
      %p166 = por %p164, %p165
      %p167 = scmp.ne.s32.totalorder %s159, %s161
      %p168 = scmp.eq.s32.totalorder %s25, 3
      %p169 = por %p167, %p168
      %p170 = scmp.ne.s32.totalorder %s161, %s162
      %p171 = scmp.eq.s32.totalorder %s25, 0
      %p172 = por %p170, %p171
      %p173 = scmp.ne.s32.totalorder %s161, %s162
      %p174 = scmp.eq.s32.totalorder %s26, 3
      %p175 = por %p173, %p174
      %p177 = scmp.ne.s32.totalorder %s162, %s176
      %p178 = scmp.eq.s32.totalorder %s26, 0
      %p179 = por %p177, %p178
      %s181 = sadd.s32 %s180, 1
      %p184 = scmp.eq.s32.totalorder %s20, 3
      %p185 = scmp.ne.s32.totalorder %s180, %s182
      %p186 = scmp.eq.s32.totalorder %s20, 0
      %p187 = por %p185, %p186
      %p188 = scmp.ne.s32.totalorder %s180, %s182
      %p189 = scmp.eq.s32.totalorder %s25, 3
      %p190 = por %p188, %p189
      %p191 = scmp.ne.s32.totalorder %s182, %s183
      %p192 = scmp.eq.s32.totalorder %s25, 0
      %p193 = por %p191, %p192
      %p194 = scmp.ne.s32.totalorder %s182, %s183
      %p195 = scmp.eq.s32.totalorder %s26, 3
      %p196 = por %p194, %p195
      %p198 = scmp.ne.s32.totalorder %s183, %s197
      %p199 = scmp.eq.s32.totalorder %s26, 0
      %p200 = por %p198, %p199
      %s202 = sadd.s32 %s201, 1
      %p205 = scmp.eq.s32.totalorder %s20, 3
      %p206 = scmp.ne.s32.totalorder %s201, %s203
      %p207 = scmp.eq.s32.totalorder %s20, 0
      %p208 = por %p206, %p207
      %p209 = scmp.ne.s32.totalorder %s201, %s203
      %p210 = scmp.eq.s32.totalorder %s25, 3
      %p211 = por %p209, %p210
      %p212 = scmp.ne.s32.totalorder %s203, %s204
      %p213 = scmp.eq.s32.totalorder %s25, 0
      %p214 = por %p212, %p213
      %p215 = scmp.ne.s32.totalorder %s203, %s204
      %p216 = scmp.eq.s32.totalorder %s26, 3
      %p217 = por %p215, %p216
      %p219 = scmp.ne.s32.totalorder %s204, %s218
      %p220 = scmp.eq.s32.totalorder %s26, 0
      %p221 = por %p219, %p220
      %s222 = ssub.s32 %s20, %s27
      %p223 = scmp.eq.s32.totalorder %s222, 0
      %s225 = sadd.s32 %s224, 1
      %s226 = scalar_select %p223, %s224, %s225
      %p229 = pneg %p223
      %p230 = scmp.eq.s32.totalorder %s20, 3
      %p231 = por %p229, %p230
      %p232 = scmp.ne.s32.totalorder %s224, %s227
      %p233 = scmp.eq.s32.totalorder %s20, 0
      %p234 = por %p232, %p233
      %p235 = scmp.ne.s32.totalorder %s224, %s227
      %p236 = scmp.eq.s32.totalorder %s25, 3
      %p237 = por %p235, %p236
      %p238 = scmp.ne.s32.totalorder %s227, %s228
      %p239 = scmp.eq.s32.totalorder %s25, 0
      %p240 = por %p238, %p239
      %p241 = scmp.ne.s32.totalorder %s227, %s228
      %p242 = scmp.eq.s32.totalorder %s26, 3
      %p243 = por %p241, %p242
      %p245 = scmp.ne.s32.totalorder %s228, %s244
      %p246 = scmp.eq.s32.totalorder %s26, 0
      %p247 = por %p245, %p246
      %p248 = scmp.le.s32.totalorder 1, %s20
      %p249 = scmp.lt.s32.totalorder %s20, 5
      %p250 = pnand %p248, %p249
      %p251 = pneg %p250
      // Predicated region
      $region9: #{tpu_custom_call.1} parent=5 // pred_check
        _
      $region10: #{tpu_custom_call.1} parent=5 // pred_check_branch
        %253 = sbr.rel (%p250) target = $region12
      $region11: #{tpu_custom_call.1} parent=5 // pred_region
        %s254 = ssub.s32 %s20, 1
        // Predicated region
        $region13: #{tpu_custom_call.1} parent=11 // pred_check
          %p255 = pneg %p67
        $region14: #{tpu_custom_call.1} parent=11 // pred_check_branch
          %257 = sbr.rel (%p255) target = $region16
        $region15: #{tpu_custom_call.1} parent=11 // pred_region
          _
        $region16: #{tpu_custom_call.1} parent=11 // pred_fallthru
          _
        // Predicated region
        $region17: #{tpu_custom_call.1} parent=11 // pred_check
          %p258 = pneg %p88
        $region18: #{tpu_custom_call.1} parent=11 // pred_check_branch
          %260 = sbr.rel (%p258) target = $region20
        $region19: #{tpu_custom_call.1} parent=11 // pred_region
          _
        $region20: #{tpu_custom_call.1} parent=11 // pred_fallthru
          _
        // Predicated region
        $region21: #{tpu_custom_call.1} parent=11 // pred_check
          %p261 = pneg %p109
        $region22: #{tpu_custom_call.1} parent=11 // pred_check_branch
          %263 = sbr.rel (%p261) target = $region24
        $region23: #{tpu_custom_call.1} parent=11 // pred_region
          _
        $region24: #{tpu_custom_call.1} parent=11 // pred_fallthru
          _
        // Predicated region
        $region25: #{tpu_custom_call.1} parent=11 // pred_check
          %p264 = pneg %p130
        $region26: #{tpu_custom_call.1} parent=11 // pred_check_branch
          %266 = sbr.rel (%p264) target = $region28
        $region27: #{tpu_custom_call.1} parent=11 // pred_region
          _
        $region28: #{tpu_custom_call.1} parent=11 // pred_fallthru
          _
        // Predicated region
        $region29: #{tpu_custom_call.1} parent=11 // pred_check
          %p267 = pneg %p151
        $region30: #{tpu_custom_call.1} parent=11 // pred_check_branch
          %269 = sbr.rel (%p267) target = $region32
        $region31: #{tpu_custom_call.1} parent=11 // pred_region
          %271 = vsyncadd [#allocation3], 0
          %s272 = sshll.u32 %s5, 4
          %s273 = int_to_ptr.hbm [resolvable:$true] %s272
          %s274 = sshll.u32 [#allocation2], 4
          %s275 = int_to_ptr.vmem [resolvable:$true] %s274
          %280 = dma.hbm_to_vmem [thread:$0]  %s273, 1024, %s275, [#allocation3], 64, 64, 4
        $region32: #{tpu_custom_call.1} parent=11 // pred_fallthru
          _
        // Predicated region
        $region33: #{tpu_custom_call.1} parent=11 // pred_check
          %p281 = pneg %p172
        $region34: #{tpu_custom_call.1} parent=11 // pred_check_branch
          %283 = sbr.rel (%p281) target = $region36
        $region35: #{tpu_custom_call.1} parent=11 // pred_region
          _
        $region36: #{tpu_custom_call.1} parent=11 // pred_fallthru
          _
        // Predicated region
        $region37: #{tpu_custom_call.1} parent=11 // pred_check
          %p284 = pneg %p193
        $region38: #{tpu_custom_call.1} parent=11 // pred_check_branch
          %286 = sbr.rel (%p284) target = $region40
        $region39: #{tpu_custom_call.1} parent=11 // pred_region
          %288 = vsyncadd [#allocation6], 0
          %s289 = sshll.u32 %s7, 4
          %s290 = int_to_ptr.hbm [resolvable:$true] %s289
          %s291 = sshll.u32 [#allocation5], 4
          %s292 = int_to_ptr.vmem [resolvable:$true] %s291
          %297 = dma.hbm_to_vmem [thread:$0]  %s290, 1024, %s292, [#allocation6], 64, 64, 4
        $region40: #{tpu_custom_call.1} parent=11 // pred_fallthru
          _
        // Predicated region
        $region41: #{tpu_custom_call.1} parent=11 // pred_check
          %p298 = pneg %p214
        $region42: #{tpu_custom_call.1} parent=11 // pred_check_branch
          %300 = sbr.rel (%p298) target = $region44
        $region43: #{tpu_custom_call.1} parent=11 // pred_region
          _
        $region44: #{tpu_custom_call.1} parent=11 // pred_fallthru
          _
      $region12: #{tpu_custom_call.1} parent=5 // pred_fallthru
        _
      %p301 = scmp.lt.s32.totalorder %s20, 4
      // Predicated region
      $region45: #{tpu_custom_call.1} parent=5 // pred_check
        %p302 = pneg %p301
      $region46: #{tpu_custom_call.1} parent=5 // pred_check_branch
        %304 = sbr.rel (%p302) target = $region48
      $region47: #{tpu_custom_call.1} parent=5 // pred_region
        // Predicated region
        $region49: #{tpu_custom_call.1} parent=47 // pred_check
          %p305 = pneg %p40
        $region50: #{tpu_custom_call.1} parent=47 // pred_check_branch
          %307 = sbr.rel (%p305) target = $region52
        $region51: #{tpu_custom_call.1} parent=47 // pred_region
          %s308 = smul.u32 2, %s20
          %p309 = scmp.lt.s32.totalorder %s308, 7
          %s310 = scalar_select %p309, %s308, 7
          %s311 = smul.addr %s310, 8
          %s312 = scalar_lea.vmem %s0, %s311
          %s313 = smul.u32 2, %s20
        $region52: #{tpu_custom_call.1} parent=47 // pred_fallthru
          _
      $region48: #{tpu_custom_call.1} parent=5 // pred_fallthru
        _
      %p314 = scmp.le.s32.totalorder 1, %s20
      %p315 = scmp.lt.s32.totalorder %s20, 5
      %p316 = pnand %p314, %p315
      %p317 = pneg %p316
      // Predicated region
      $region53: #{tpu_custom_call.1} parent=5 // pred_check
        _
      $region54: #{tpu_custom_call.1} parent=5 // pred_check_branch
        %319 = sbr.rel (%p316) target = $region56
      $region55: #{tpu_custom_call.1} parent=5 // pred_region
        %s320 = ssub.s32 %s20, 1
        // Predicated region
        $region57: #{tpu_custom_call.1} parent=55 // pred_check
          %p321 = pneg %p151
        $region58: #{tpu_custom_call.1} parent=55 // pred_check_branch
          %323 = sbr.rel (%p321) target = $region60
        $region59: #{tpu_custom_call.1} parent=55 // pred_region
          %325 = dma.done [#allocation3], 1024
        $region60: #{tpu_custom_call.1} parent=55 // pred_fallthru
          _
        // Predicated region
        $region61: #{tpu_custom_call.1} parent=55 // pred_check
          %p326 = pneg %p193
        $region62: #{tpu_custom_call.1} parent=55 // pred_check_branch
          %328 = sbr.rel (%p326) target = $region64
        $region63: #{tpu_custom_call.1} parent=55 // pred_region
          %330 = dma.done [#allocation6], 1024
        $region64: #{tpu_custom_call.1} parent=55 // pred_fallthru
          _
        %s331 = smul.u32 2, %s25
        %p332 = scmp.lt.s32.totalorder %s331, 7
        %s333 = scalar_select %p332, %s331, 7
        %s334 = smul.addr %s333, 8
        %s335 = scalar_lea.vmem %s0, %s334
        %p336 = pneg %p46
        %p337 = pneg %p43
        %p338 = pneg %p67
        %p339 = pneg %p64
        %p340 = pneg %p88
        %p341 = pneg %p85
        %p342 = pneg %p109
        %p343 = pneg %p106
        %p344 = pneg %p130
        %p345 = pneg %p127
        %p346 = pneg %p151
        %p347 = pneg %p148
        %p348 = pneg %p172
        %p349 = pneg %p169
        %p350 = pneg %p193
        %p351 = pneg %p190
        %p352 = pneg %p214
        %p353 = pneg %p211
        %p354 = pneg %p240
        %p355 = pneg %p237
        %s356 = sand.u32 %s227, 1
        %s357 = scalar_lea.sflag [#allocation4], %s356
        %s358 = sand.u32 %s227, 1
        %s359 = smul.addr %s358, 16
        %s360 = scalar_lea.vmem [#allocation7], %s359
        %s361 = smul.u32 2, %s25
        %p362 = scmp.lt.s32.totalorder %s361, 7
        %s363 = scalar_select %p362, %s361, 7
        %s364 = smul.addr %s363, 8
        %s365 = scalar_lea.vmem %s0, %s364
        %s366 = smul.u32 2, %s25
        %s367 = smul.u32 2, %s25
        %v369 = vld [vmem:[%s365] sm:$0xff]
        %v370 = vld [vmem:[%s365 + $0x8] sm:$0xff]
        %v371 = vpack.c.bf16 %v370, %v369
        %v372 = vld [vmem:[%s1] sm:$0xf]
        %v373 = vld [vmem:[%s1 + $0x4] sm:$0xf]
        %v374 = vld [vmem:[%s2] sm:$0x1]
        %v376 = vperm.slane %v374, 0
        %v380 = vunpack.c.l.b16 %v372
        %v381 = vunpack.c.l.b16 %v373
        %v382 = vpack.c.b16 %v381, %v380
        %vm384 = vcmask 130048
        %v386 = vsel %vm384, %v371, 0
        %388 = vmatpush.bf16.msra.mxu0 0
        %389 = vmatpush.bf16.msra.mxu0 0
        %390 = vmatpush.bf16.msra.mxu0 0
        %391 = vmatpush.bf16.msra.mxu0 0
        %392 = vmatpush.bf16.msra.mxu0 0
        %393 = vmatpush.bf16.msra.mxu0 0
        %394 = vmatpush.bf16.msra.mxu0 0
        %395 = vmatpush.bf16.msra.mxu0 %v382
        %396 = vmatmul.bf16.gmra.mxu0 %v386
        %v397 = vpop.f32.mrf.mxu0
        %v398 = vadd.f32 %v376, %v397
        %v399 = vpop.f32.mrf.mxu0
        %v400 = vadd.f32 %v376, %v399
        %401 = vdwg.mxu0
        %v402 = vmax.f32 %v398, 0.0
        %v403 = vmax.f32 %v400, 0.0
        %v404 = vpack.c.bf16 %v403, %v402
        %v405 = vld [vmem:[%s3] sm:$0xf]
        %v406 = vld [vmem:[%s3 + $0x4] sm:$0xf]
        %v407 = vld [vmem:[%s3 + $0x8] sm:$0xf]
        %v408 = vld [vmem:[%s3 + $0xc] sm:$0xf]
        %v409 = vld [vmem:[%s3 + $0x10] sm:$0xf]
        %v410 = vld [vmem:[%s3 + $0x14] sm:$0xf]
        %v411 = vld [vmem:[%s3 + $0x18] sm:$0xf]
        %v412 = vld [vmem:[%s3 + $0x1c] sm:$0xf]
        %v413 = vld [vmem:[%s3 + $0x20] sm:$0xf]
        %v414 = vld [vmem:[%s3 + $0x24] sm:$0xf]
        %v415 = vld [vmem:[%s3 + $0x28] sm:$0xf]
        %v416 = vld [vmem:[%s3 + $0x2c] sm:$0xf]
        %v417 = vld [vmem:[%s3 + $0x30] sm:$0xf]
        %v418 = vld [vmem:[%s3 + $0x34] sm:$0xf]
        %v419 = vld [vmem:[%s3 + $0x38] sm:$0xf]
        %v420 = vld [vmem:[%s3 + $0x3c] sm:$0xf]
        %v421 = vld [vmem:[%s4] sm:$0x1]
        %v423 = vperm.slane %v421, 0
        %v441 = vunpack.c.l.b16 %v405
        %v442 = vunpack.c.l.b16 %v406
        %v443 = vunpack.c.l.b16 %v407
        %v444 = vunpack.c.l.b16 %v408
        %v445 = vunpack.c.l.b16 %v409
        %v446 = vunpack.c.l.b16 %v410
        %v447 = vunpack.c.l.b16 %v411
        %v448 = vunpack.c.l.b16 %v412
        %v449 = vunpack.c.l.b16 %v413
        %v450 = vunpack.c.l.b16 %v414
        %v451 = vunpack.c.l.b16 %v415
        %v452 = vunpack.c.l.b16 %v416
        %v453 = vunpack.c.l.b16 %v417
        %v454 = vunpack.c.l.b16 %v418
        %v455 = vunpack.c.l.b16 %v419
        %v456 = vunpack.c.l.b16 %v420
        %v457 = vpack.c.b16 %v442, %v441
        %v458 = vpack.c.b16 %v444, %v443
        %v459 = vpack.c.b16 %v446, %v445
        %v460 = vpack.c.b16 %v448, %v447
        %v461 = vpack.c.b16 %v450, %v449
        %v462 = vpack.c.b16 %v452, %v451
        %v463 = vpack.c.b16 %v454, %v453
        %v464 = vpack.c.b16 %v456, %v455
        %473 = vmatpush.bf16.msra.mxu0 %v464
        %474 = vmatpush.bf16.msra.mxu0 %v463
        %475 = vmatpush.bf16.msra.mxu0 %v462
        %476 = vmatpush.bf16.msra.mxu0 %v461
        %477 = vmatpush.bf16.msra.mxu0 %v460
        %478 = vmatpush.bf16.msra.mxu0 %v459
        %479 = vmatpush.bf16.msra.mxu0 %v458
        %480 = vmatpush.bf16.msra.mxu0 %v457
        %481 = vmatmul.bf16.gmra.mxu0 %v404
        %v482 = vpop.f32.mrf.mxu0
        %v483 = vadd.f32 %v423, %v482
        %v484 = vpop.f32.mrf.mxu0
        %v485 = vadd.f32 %v423, %v484
        %486 = vdwg.mxu0
        %v487 = vmax.f32 %v483, 0.0
        %v488 = vmax.f32 %v485, 0.0
        %v489 = vpack.c.bf16 %v488, %v487
        %v490 = vld [vmem:[#allocation2] sm:$0xf]
        %v491 = vld [vmem:[#allocation2 + $0x4] sm:$0xf]
        %v492 = vld [vmem:[#allocation2 + $0x8] sm:$0xf]
        %v493 = vld [vmem:[#allocation2 + $0xc] sm:$0xf]
        %v494 = vld [vmem:[#allocation2 + $0x10] sm:$0xf]
        %v495 = vld [vmem:[#allocation2 + $0x14] sm:$0xf]
        %v496 = vld [vmem:[#allocation2 + $0x18] sm:$0xf]
        %v497 = vld [vmem:[#allocation2 + $0x1c] sm:$0xf]
        %v498 = vld [vmem:[#allocation2 + $0x20] sm:$0xf]
        %v499 = vld [vmem:[#allocation2 + $0x24] sm:$0xf]
        %v500 = vld [vmem:[#allocation2 + $0x28] sm:$0xf]
        %v501 = vld [vmem:[#allocation2 + $0x2c] sm:$0xf]
        %v502 = vld [vmem:[#allocation2 + $0x30] sm:$0xf]
        %v503 = vld [vmem:[#allocation2 + $0x34] sm:$0xf]
        %v504 = vld [vmem:[#allocation2 + $0x38] sm:$0xf]
        %v505 = vld [vmem:[#allocation2 + $0x3c] sm:$0xf]
        %v506 = vld [vmem:[%s6] sm:$0x1]
        %v508 = vperm.slane %v506, 0
        %v526 = vunpack.c.l.b16 %v490
        %v527 = vunpack.c.l.b16 %v491
        %v528 = vunpack.c.l.b16 %v492
        %v529 = vunpack.c.l.b16 %v493
        %v530 = vunpack.c.l.b16 %v494
        %v531 = vunpack.c.l.b16 %v495
        %v532 = vunpack.c.l.b16 %v496
        %v533 = vunpack.c.l.b16 %v497
        %v534 = vunpack.c.l.b16 %v498
        %v535 = vunpack.c.l.b16 %v499
        %v536 = vunpack.c.l.b16 %v500
        %v537 = vunpack.c.l.b16 %v501
        %v538 = vunpack.c.l.b16 %v502
        %v539 = vunpack.c.l.b16 %v503
        %v540 = vunpack.c.l.b16 %v504
        %v541 = vunpack.c.l.b16 %v505
        %v542 = vpack.c.b16 %v527, %v526
        %v543 = vpack.c.b16 %v529, %v528
        %v544 = vpack.c.b16 %v531, %v530
        %v545 = vpack.c.b16 %v533, %v532
        %v546 = vpack.c.b16 %v535, %v534
        %v547 = vpack.c.b16 %v537, %v536
        %v548 = vpack.c.b16 %v539, %v538
        %v549 = vpack.c.b16 %v541, %v540
        %558 = vmatpush.bf16.msra.mxu0 %v549
        %559 = vmatpush.bf16.msra.mxu0 %v548
        %560 = vmatpush.bf16.msra.mxu0 %v547
        %561 = vmatpush.bf16.msra.mxu0 %v546
        %562 = vmatpush.bf16.msra.mxu0 %v545
        %563 = vmatpush.bf16.msra.mxu0 %v544
        %564 = vmatpush.bf16.msra.mxu0 %v543
        %565 = vmatpush.bf16.msra.mxu0 %v542
        %566 = vmatmul.bf16.gmra.mxu0 %v489
        %v567 = vpop.f32.mrf.mxu0
        %v568 = vadd.f32 %v508, %v567
        %v569 = vpop.f32.mrf.mxu0
        %v570 = vadd.f32 %v508, %v569
        %571 = vdwg.mxu0
        %v572 = vmax.f32 %v568, 0.0
        %v573 = vmax.f32 %v570, 0.0
        %v574 = vpack.c.bf16 %v573, %v572
        %v575 = vld [vmem:[#allocation5] sm:$0xf]
        %v576 = vld [vmem:[#allocation5 + $0x4] sm:$0xf]
        %v577 = vld [vmem:[#allocation5 + $0x8] sm:$0xf]
        %v578 = vld [vmem:[#allocation5 + $0xc] sm:$0xf]
        %v579 = vld [vmem:[#allocation5 + $0x10] sm:$0xf]
        %v580 = vld [vmem:[#allocation5 + $0x14] sm:$0xf]
        %v581 = vld [vmem:[#allocation5 + $0x18] sm:$0xf]
        %v582 = vld [vmem:[#allocation5 + $0x1c] sm:$0xf]
        %v583 = vld [vmem:[#allocation5 + $0x20] sm:$0xf]
        %v584 = vld [vmem:[#allocation5 + $0x24] sm:$0xf]
        %v585 = vld [vmem:[#allocation5 + $0x28] sm:$0xf]
        %v586 = vld [vmem:[#allocation5 + $0x2c] sm:$0xf]
        %v587 = vld [vmem:[#allocation5 + $0x30] sm:$0xf]
        %v588 = vld [vmem:[#allocation5 + $0x34] sm:$0xf]
        %v589 = vld [vmem:[#allocation5 + $0x38] sm:$0xf]
        %v590 = vld [vmem:[#allocation5 + $0x3c] sm:$0xf]
        %v591 = vld [vmem:[%s8] sm:$0x1]
        %v593 = vperm.slane %v591, 0
        %v611 = vunpack.c.l.b16 %v575
        %v612 = vunpack.c.l.b16 %v576
        %v613 = vunpack.c.l.b16 %v577
        %v614 = vunpack.c.l.b16 %v578
        %v615 = vunpack.c.l.b16 %v579
        %v616 = vunpack.c.l.b16 %v580
        %v617 = vunpack.c.l.b16 %v581
        %v618 = vunpack.c.l.b16 %v582
        %v619 = vunpack.c.l.b16 %v583
        %v620 = vunpack.c.l.b16 %v584
        %v621 = vunpack.c.l.b16 %v585
        %v622 = vunpack.c.l.b16 %v586
        %v623 = vunpack.c.l.b16 %v587
        %v624 = vunpack.c.l.b16 %v588
        %v625 = vunpack.c.l.b16 %v589
        %v626 = vunpack.c.l.b16 %v590
        %v627 = vpack.c.b16 %v612, %v611
        %v628 = vpack.c.b16 %v614, %v613
        %v629 = vpack.c.b16 %v616, %v615
        %v630 = vpack.c.b16 %v618, %v617
        %v631 = vpack.c.b16 %v620, %v619
        %v632 = vpack.c.b16 %v622, %v621
        %v633 = vpack.c.b16 %v624, %v623
        %v634 = vpack.c.b16 %v626, %v625
        %643 = vmatpush.bf16.msra.mxu0 %v634
        %644 = vmatpush.bf16.msra.mxu0 %v633
        %645 = vmatpush.bf16.msra.mxu0 %v632
        %646 = vmatpush.bf16.msra.mxu0 %v631
        %647 = vmatpush.bf16.msra.mxu0 %v630
        %648 = vmatpush.bf16.msra.mxu0 %v629
        %649 = vmatpush.bf16.msra.mxu0 %v628
        %650 = vmatpush.bf16.msra.mxu0 %v627
        %651 = vmatmul.bf16.gmra.mxu0 %v574
        %v652 = vpop.f32.mrf.mxu0
        %v653 = vadd.f32 %v593, %v652
        %v654 = vpop.f32.mrf.mxu0
        %v655 = vadd.f32 %v593, %v654
        %656 = vdwg.mxu0
        %657 = vst [vmem:[%s360] sm:$0xff] %v653
        %658 = vst [vmem:[%s360 + $0x8] sm:$0xff] %v655
        %s659 = sand.u32 %s227, 1
        %s660 = scalar_lea.sflag [#allocation4], %s659
        %s661 = sand.u32 %s227, 1
        %s662 = smul.addr %s661, 16
        %s663 = scalar_lea.vmem [#allocation7], %s662
        // Predicated region
        $region65: #{tpu_custom_call.1} parent=55 // pred_check
          %p664 = pneg %p237
        $region66: #{tpu_custom_call.1} parent=55 // pred_check_branch
          %666 = sbr.rel (%p664) target = $region68
        $region67: #{tpu_custom_call.1} parent=55 // pred_region
          %s667 = smul.u32 2, %s25
          %669 = vsyncadd %s660, 0
          %s670 = smul.addr %s667, 8
          %s671 = scalar_lea.hbm %s9, %s670
          %s672 = sshll.u32 %s663, 4
          %s673 = int_to_ptr.vmem [resolvable:$true] %s672
          %s674 = sshll.u32 %s671, 4
          %s675 = int_to_ptr.hbm [resolvable:$true] %s674
          %680 = dma.vmem_to_hbm [thread:$0]  %s673, 256, %s675, %s660, 128, 128, 8
        $region68: #{tpu_custom_call.1} parent=55 // pred_fallthru
          _
      $region56: #{tpu_custom_call.1} parent=5 // pred_fallthru
        _
      %p681 = scmp.le.s32.totalorder 2, %s20
      // Predicated region
      $region69: #{tpu_custom_call.1} parent=5 // pred_check
        %p682 = pneg %p681
      $region70: #{tpu_custom_call.1} parent=5 // pred_check_branch
        %684 = sbr.rel (%p682) target = $region72
      $region71: #{tpu_custom_call.1} parent=5 // pred_region
        %s685 = ssub.s32 %s20, 2
        // Predicated region
        $region73: #{tpu_custom_call.1} parent=71 // pred_check
          %p686 = pneg %p243
        $region74: #{tpu_custom_call.1} parent=71 // pred_check_branch
          %688 = sbr.rel (%p686) target = $region76
        $region75: #{tpu_custom_call.1} parent=71 // pred_region
          %s689 = sand.u32 %s228, 1
          %s690 = scalar_lea.sflag [#allocation4], %s689
          %s691 = sand.u32 %s228, 1
          %s692 = smul.addr %s691, 16
          %s693 = scalar_lea.vmem [#allocation7], %s692
          %695 = dma.done %s690, 256
        $region76: #{tpu_custom_call.1} parent=71 // pred_fallthru
          _
      $region72: #{tpu_custom_call.1} parent=5 // pred_fallthru
        _
    $region6: #{tpu_custom_call.1} parent=1 // loop_footer
      %s24 = sadd.s32 1, %s20
    $region7: #{tpu_custom_call.1} parent=1 // loop_footer_branch
      %19 = sbr.rel target = $region3
    $region8: #{tpu_custom_call.1} parent=1 // loop_exit
      _
    %696 = vsyncpa [#allocation3], 1
    %s697 = scalar_lea.sflag [#allocation3], 1
    %698 = vsyncpa %s697, 1
    %699 = vsyncpa [#allocation6], 1
    %700 = vsyncpa [#allocation4], 1
    %s701 = scalar_lea.sflag [#allocation4], 1
    %702 = vsyncpa %s701, 1

// kernel: tpu_custom_call.1
$region0: #{tpu_custom_call.1}
  #allocation0 [shape = 'u32[]', space=smem, size = 0x4, offset = 0x4, fixed_abs, tag = 'smem constant byte address 0x4 - core index']
  #allocation1 [shape = 'u32[72,128]{1,0:T(1,128)}', space=vmem, size = 0x9000, scoped, tag = 'internal scratch']
  %s0 = inlined_call_operand.vmem [shape: f32[64,16], index: 0, kind: input, shape index: {}]
  %s1 = inlined_call_operand.vmem [shape: bf16[16,128], index: 1, kind: input, shape index: {}]
  %s2 = inlined_call_operand.vmem [shape: f32[1,128], index: 2, kind: input, shape index: {}]
  %s3 = inlined_call_operand.vmem [shape: bf16[128,128], index: 3, kind: input, shape index: {}]
  %s4 = inlined_call_operand.vmem [shape: f32[1,128], index: 4, kind: input, shape index: {}]
  %s5 = inlined_call_operand.hbm [shape: bf16[128,128], index: 5, kind: input, shape index: {}]
  %s6 = inlined_call_operand.vmem [shape: f32[1,128], index: 6, kind: input, shape index: {}]
  %s7 = inlined_call_operand.hbm [shape: bf16[128,128], index: 7, kind: input, shape index: {}]
  %s8 = inlined_call_operand.vmem [shape: f32[1,128], index: 8, kind: input, shape index: {}]
  %s9 = inlined_call_operand.hbm [shape: f32[64,128], index: 9, kind: output, shape index: {}]
  %s10 = sld [smem:[#allocation0]]
  $region77: #{tpu_custom_call.1} parent=0
    _
  %s12 = ssub.s32 1, %s10
  %s13 = scalar_select 0, %s12, %s10
  $region1: #{tpu_custom_call.1} parent=0
    #allocation2 [shape = 'u8[32768]{0}', space=vmem, size = 0x8000, scoped, tag = 'input window, operand 5, single buffered']
    #allocation3 [shape = 's32[2]{0}', space=sflag, size = 0x8, scoped, tag = 'scoped memory for tpu_custom_call.1']
    #allocation4 [shape = 's32[2]{0}', space=sflag, size = 0x8, scoped, tag = 'scoped memory for tpu_custom_call.1']
    #allocation5 [shape = 'u8[32768]{0}', space=vmem, size = 0x8000, scoped, tag = 'input window, operand 7, single buffered']
    #allocation6 [shape = 's32[1]{0}', space=sflag, size = 0x4, scoped, tag = 'scoped memory for tpu_custom_call.1']
    #allocation7 [shape = 'u8[16384]{0}', space=vmem, size = 0x4000, scoped, tag = 'output window, operand 0']
    %14 = vsyncpa [#allocation3], 0
    %15 = vsyncpa [#allocation6], 0
    %16 = vsyncpa [#allocation4], 0
    %s17 = scalar_lea.sflag [#allocation4], 1
    %18 = vsyncpa %s17, 0
    loop: start=0, step=1, limit=6
    $region2: #{tpu_custom_call.1} parent=1 // loop_pre_header
      _
    $region3: #{tpu_custom_call.1} parent=1 // loop_header
      %s20 = sphi 0, %s24
      %p21 = scmp.ge.s32.totalorder %s20, 6
      %s30 = sphi 0, %s32
      %s33 = sphi 0, %s30
      %s34 = sphi 0, %s33
      %s50 = sphi 0, %s34
      %s54 = sphi 0, %s54
      %s56 = sphi 0, %s54
      %s57 = sphi 0, %s56
      %s71 = sphi 0, %s57
      %s75 = sphi 0, %s75
      %s77 = sphi 0, %s75
      %s78 = sphi 0, %s77
      %s92 = sphi 0, %s78
      %s96 = sphi 0, %s96
      %s98 = sphi 0, %s96
      %s99 = sphi 0, %s98
      %s113 = sphi 0, %s99
      %s117 = sphi 0, %s117
      %s119 = sphi 0, %s117
      %s120 = sphi 0, %s119
      %s134 = sphi 0, %s120
      %s138 = sphi 0, %s138
      %s140 = sphi 0, %s138
      %s141 = sphi 0, %s140
      %s155 = sphi 0, %s141
      %s159 = sphi 0, %s159
      %s161 = sphi 0, %s159
      %s162 = sphi 0, %s161
      %s176 = sphi 0, %s162
      %s180 = sphi 0, %s180
      %s182 = sphi 0, %s180
      %s183 = sphi 0, %s182
      %s197 = sphi 0, %s183
      %s201 = sphi 0, %s201
      %s203 = sphi 0, %s201
      %s204 = sphi 0, %s203
      %s218 = sphi 0, %s204
      %s224 = sphi 0, %s226
      %s227 = sphi 0, %s224
      %s228 = sphi 0, %s227
      %s244 = sphi 0, %s228
    $region4: #{tpu_custom_call.1} parent=1 // loop_header_branch
      %23 = sbr.rel (%p21) target = $region8
    $region5: #{tpu_custom_call.1} parent=1 // loop_body
      %s25 = ssub.s32 %s20, 1
      %s26 = ssub.s32 %s20, 2
      %s27 = sadd.s32 %s20, 1
      %s28 = ssub.s32 %s20, %s27
      %p29 = scmp.eq.s32.totalorder %s28, 0
      %s31 = sadd.s32 %s30, 1
      %s32 = scalar_select %p29, %s30, %s31
      %p35 = pneg %p29
      %p36 = scmp.eq.s32.totalorder %s20, 3
      %p37 = por %p35, %p36
      %p38 = scmp.ne.s32.totalorder %s30, %s33
      %p39 = scmp.eq.s32.totalorder %s20, 0
      %p40 = por %p38, %p39
      %p41 = scmp.ne.s32.totalorder %s30, %s33
      %p42 = scmp.eq.s32.totalorder %s25, 3
      %p43 = por %p41, %p42
      %p44 = scmp.ne.s32.totalorder %s33, %s34
      %p45 = scmp.eq.s32.totalorder %s25, 0
      %p46 = por %p44, %p45
      %p47 = scmp.ne.s32.totalorder %s33, %s34
      %p48 = scmp.eq.s32.totalorder %s26, 3
      %p49 = por %p47, %p48
      %p51 = scmp.ne.s32.totalorder %s34, %s50
      %p52 = scmp.eq.s32.totalorder %s26, 0
      %p53 = por %p51, %p52
      %s55 = sadd.s32 %s54, 1
      %p58 = scmp.eq.s32.totalorder %s20, 3
      %p59 = scmp.ne.s32.totalorder %s54, %s56
      %p60 = scmp.eq.s32.totalorder %s20, 0
      %p61 = por %p59, %p60
      %p62 = scmp.ne.s32.totalorder %s54, %s56
      %p63 = scmp.eq.s32.totalorder %s25, 3
      %p64 = por %p62, %p63
      %p65 = scmp.ne.s32.totalorder %s56, %s57
      %p66 = scmp.eq.s32.totalorder %s25, 0
      %p67 = por %p65, %p66
      %p68 = scmp.ne.s32.totalorder %s56, %s57
      %p69 = scmp.eq.s32.totalorder %s26, 3
      %p70 = por %p68, %p69
      %p72 = scmp.ne.s32.totalorder %s57, %s71
      %p73 = scmp.eq.s32.totalorder %s26, 0
      %p74 = por %p72, %p73
      %s76 = sadd.s32 %s75, 1
      %p79 = scmp.eq.s32.totalorder %s20, 3
      %p80 = scmp.ne.s32.totalorder %s75, %s77
      %p81 = scmp.eq.s32.totalorder %s20, 0
      %p82 = por %p80, %p81
      %p83 = scmp.ne.s32.totalorder %s75, %s77
      %p84 = scmp.eq.s32.totalorder %s25, 3
      %p85 = por %p83, %p84
      %p86 = scmp.ne.s32.totalorder %s77, %s78
      %p87 = scmp.eq.s32.totalorder %s25, 0
      %p88 = por %p86, %p87
      %p89 = scmp.ne.s32.totalorder %s77, %s78
      %p90 = scmp.eq.s32.totalorder %s26, 3
      %p91 = por %p89, %p90
      %p93 = scmp.ne.s32.totalorder %s78, %s92
      %p94 = scmp.eq.s32.totalorder %s26, 0
      %p95 = por %p93, %p94
      %s97 = sadd.s32 %s96, 1
      %p100 = scmp.eq.s32.totalorder %s20, 3
      %p101 = scmp.ne.s32.totalorder %s96, %s98
      %p102 = scmp.eq.s32.totalorder %s20, 0
      %p103 = por %p101, %p102
      %p104 = scmp.ne.s32.totalorder %s96, %s98
      %p105 = scmp.eq.s32.totalorder %s25, 3
      %p106 = por %p104, %p105
      %p107 = scmp.ne.s32.totalorder %s98, %s99
      %p108 = scmp.eq.s32.totalorder %s25, 0
      %p109 = por %p107, %p108
      %p110 = scmp.ne.s32.totalorder %s98, %s99
      %p111 = scmp.eq.s32.totalorder %s26, 3
      %p112 = por %p110, %p111
      %p114 = scmp.ne.s32.totalorder %s99, %s113
      %p115 = scmp.eq.s32.totalorder %s26, 0
      %p116 = por %p114, %p115
      %s118 = sadd.s32 %s117, 1
      %p121 = scmp.eq.s32.totalorder %s20, 3
      %p122 = scmp.ne.s32.totalorder %s117, %s119
      %p123 = scmp.eq.s32.totalorder %s20, 0
      %p124 = por %p122, %p123
      %p125 = scmp.ne.s32.totalorder %s117, %s119
      %p126 = scmp.eq.s32.totalorder %s25, 3
      %p127 = por %p125, %p126
      %p128 = scmp.ne.s32.totalorder %s119, %s120
      %p129 = scmp.eq.s32.totalorder %s25, 0
      %p130 = por %p128, %p129
      %p131 = scmp.ne.s32.totalorder %s119, %s120
      %p132 = scmp.eq.s32.totalorder %s26, 3
      %p133 = por %p131, %p132
      %p135 = scmp.ne.s32.totalorder %s120, %s134
      %p136 = scmp.eq.s32.totalorder %s26, 0
      %p137 = por %p135, %p136
      %s139 = sadd.s32 %s138, 1
      %p142 = scmp.eq.s32.totalorder %s20, 3
      %p143 = scmp.ne.s32.totalorder %s138, %s140
      %p144 = scmp.eq.s32.totalorder %s20, 0
      %p145 = por %p143, %p144
      %p146 = scmp.ne.s32.totalorder %s138, %s140
      %p147 = scmp.eq.s32.totalorder %s25, 3
      %p148 = por %p146, %p147
      %p149 = scmp.ne.s32.totalorder %s140, %s141
      %p150 = scmp.eq.s32.totalorder %s25, 0
      %p151 = por %p149, %p150
      %p152 = scmp.ne.s32.totalorder %s140, %s141
      %p153 = scmp.eq.s32.totalorder %s26, 3
      %p154 = por %p152, %p153
      %p156 = scmp.ne.s32.totalorder %s141, %s155
      %p157 = scmp.eq.s32.totalorder %s26, 0
      %p158 = por %p156, %p157
      %s160 = sadd.s32 %s159, 1
      %p163 = scmp.eq.s32.totalorder %s20, 3
      %p164 = scmp.ne.s32.totalorder %s159, %s161
      %p165 = scmp.eq.s32.totalorder %s20, 0
      %p166 = por %p164, %p165
      %p167 = scmp.ne.s32.totalorder %s159, %s161
      %p168 = scmp.eq.s32.totalorder %s25, 3
      %p169 = por %p167, %p168
      %p170 = scmp.ne.s32.totalorder %s161, %s162
      %p171 = scmp.eq.s32.totalorder %s25, 0
      %p172 = por %p170, %p171
      %p173 = scmp.ne.s32.totalorder %s161, %s162
      %p174 = scmp.eq.s32.totalorder %s26, 3
      %p175 = por %p173, %p174
      %p177 = scmp.ne.s32.totalorder %s162, %s176
      %p178 = scmp.eq.s32.totalorder %s26, 0
      %p179 = por %p177, %p178
      %s181 = sadd.s32 %s180, 1
      %p184 = scmp.eq.s32.totalorder %s20, 3
      %p185 = scmp.ne.s32.totalorder %s180, %s182
      %p186 = scmp.eq.s32.totalorder %s20, 0
      %p187 = por %p185, %p186
      %p188 = scmp.ne.s32.totalorder %s180, %s182
      %p189 = scmp.eq.s32.totalorder %s25, 3
      %p190 = por %p188, %p189
      %p191 = scmp.ne.s32.totalorder %s182, %s183
      %p192 = scmp.eq.s32.totalorder %s25, 0
      %p193 = por %p191, %p192
      %p194 = scmp.ne.s32.totalorder %s182, %s183
      %p195 = scmp.eq.s32.totalorder %s26, 3
      %p196 = por %p194, %p195
      %p198 = scmp.ne.s32.totalorder %s183, %s197
      %p199 = scmp.eq.s32.totalorder %s26, 0
      %p200 = por %p198, %p199
      %s202 = sadd.s32 %s201, 1
      %p205 = scmp.eq.s32.totalorder %s20, 3
      %p206 = scmp.ne.s32.totalorder %s201, %s203
      %p207 = scmp.eq.s32.totalorder %s20, 0
      %p208 = por %p206, %p207
      %p209 = scmp.ne.s32.totalorder %s201, %s203
      %p210 = scmp.eq.s32.totalorder %s25, 3
      %p211 = por %p209, %p210
      %p212 = scmp.ne.s32.totalorder %s203, %s204
      %p213 = scmp.eq.s32.totalorder %s25, 0
      %p214 = por %p212, %p213
      %p215 = scmp.ne.s32.totalorder %s203, %s204
      %p216 = scmp.eq.s32.totalorder %s26, 3
      %p217 = por %p215, %p216
      %p219 = scmp.ne.s32.totalorder %s204, %s218
      %p220 = scmp.eq.s32.totalorder %s26, 0
      %p221 = por %p219, %p220
      %s222 = ssub.s32 %s20, %s27
      %p223 = scmp.eq.s32.totalorder %s222, 0
      %s225 = sadd.s32 %s224, 1
      %s226 = scalar_select %p223, %s224, %s225
      %p229 = pneg %p223
      %p230 = scmp.eq.s32.totalorder %s20, 3
      %p231 = por %p229, %p230
      %p232 = scmp.ne.s32.totalorder %s224, %s227
      %p233 = scmp.eq.s32.totalorder %s20, 0
      %p234 = por %p232, %p233
      %p235 = scmp.ne.s32.totalorder %s224, %s227
      %p236 = scmp.eq.s32.totalorder %s25, 3
      %p237 = por %p235, %p236
      %p238 = scmp.ne.s32.totalorder %s227, %s228
      %p239 = scmp.eq.s32.totalorder %s25, 0
      %p240 = por %p238, %p239
      %p241 = scmp.ne.s32.totalorder %s227, %s228
      %p242 = scmp.eq.s32.totalorder %s26, 3
      %p243 = por %p241, %p242
      %p245 = scmp.ne.s32.totalorder %s228, %s244
      %p246 = scmp.eq.s32.totalorder %s26, 0
      %p247 = por %p245, %p246
      %p248 = scmp.le.s32.totalorder 1, %s20
      %p249 = scmp.lt.s32.totalorder %s20, 5
      %p250 = pnand %p248, %p249
      %p251 = pneg %p250
      // Predicated region
      $region9: #{tpu_custom_call.1} parent=5 // pred_check
        _
      $region10: #{tpu_custom_call.1} parent=5 // pred_check_branch
        %253 = sbr.rel (%p250) target = $region12
      $region11: #{tpu_custom_call.1} parent=5 // pred_region
        %s254 = ssub.s32 %s20, 1
        // Predicated region
        $region13: #{tpu_custom_call.1} parent=11 // pred_check
          %p255 = pneg %p67
        $region14: #{tpu_custom_call.1} parent=11 // pred_check_branch
          %257 = sbr.rel (%p255) target = $region16
        $region15: #{tpu_custom_call.1} parent=11 // pred_region
          _
        $region16: #{tpu_custom_call.1} parent=11 // pred_fallthru
          _
        // Predicated region
        $region17: #{tpu_custom_call.1} parent=11 // pred_check
          %p258 = pneg %p88
        $region18: #{tpu_custom_call.1} parent=11 // pred_check_branch
          %260 = sbr.rel (%p258) target = $region20
        $region19: #{tpu_custom_call.1} parent=11 // pred_region
          _
        $region20: #{tpu_custom_call.1} parent=11 // pred_fallthru
          _
        // Predicated region
        $region21: #{tpu_custom_call.1} parent=11 // pred_check
          %p261 = pneg %p109
        $region22: #{tpu_custom_call.1} parent=11 // pred_check_branch
          %263 = sbr.rel (%p261) target = $region24
        $region23: #{tpu_custom_call.1} parent=11 // pred_region
          _
        $region24: #{tpu_custom_call.1} parent=11 // pred_fallthru
          _
        // Predicated region
        $region25: #{tpu_custom_call.1} parent=11 // pred_check
          %p264 = pneg %p130
        $region26: #{tpu_custom_call.1} parent=11 // pred_check_branch
          %266 = sbr.rel (%p264) target = $region28
        $region27: #{tpu_custom_call.1} parent=11 // pred_region
          _
        $region28: #{tpu_custom_call.1} parent=11 // pred_fallthru
          _
        // Predicated region
        $region29: #{tpu_custom_call.1} parent=11 // pred_check
          %p267 = pneg %p151
        $region30: #{tpu_custom_call.1} parent=11 // pred_check_branch
          %269 = sbr.rel (%p267) target = $region32
        $region31: #{tpu_custom_call.1} parent=11 // pred_region
          %271 = vsyncadd [#allocation3], 0
          %s272 = sshll.u32 %s5, 4
          %s273 = int_to_ptr.hbm [resolvable:$true] %s272
          %s274 = sshll.u32 [#allocation2], 4
          %s275 = int_to_ptr.vmem [resolvable:$true] %s274
          %280 = dma.hbm_to_vmem [thread:$0]  %s273, 1024, %s275, [#allocation3], 64, 64, 4
        $region32: #{tpu_custom_call.1} parent=11 // pred_fallthru
          _
        // Predicated region
        $region33: #{tpu_custom_call.1} parent=11 // pred_check
          %p281 = pneg %p172
        $region34: #{tpu_custom_call.1} parent=11 // pred_check_branch
          %283 = sbr.rel (%p281) target = $region36
        $region35: #{tpu_custom_call.1} parent=11 // pred_region
          _
        $region36: #{tpu_custom_call.1} parent=11 // pred_fallthru
          _
        // Predicated region
        $region37: #{tpu_custom_call.1} parent=11 // pred_check
          %p284 = pneg %p193
        $region38: #{tpu_custom_call.1} parent=11 // pred_check_branch
          %286 = sbr.rel (%p284) target = $region40
        $region39: #{tpu_custom_call.1} parent=11 // pred_region
          %288 = vsyncadd [#allocation6], 0
          %s289 = sshll.u32 %s7, 4
          %s290 = int_to_ptr.hbm [resolvable:$true] %s289
          %s291 = sshll.u32 [#allocation5], 4
          %s292 = int_to_ptr.vmem [resolvable:$true] %s291
          %297 = dma.hbm_to_vmem [thread:$0]  %s290, 1024, %s292, [#allocation6], 64, 64, 4
        $region40: #{tpu_custom_call.1} parent=11 // pred_fallthru
          _
        // Predicated region
        $region41: #{tpu_custom_call.1} parent=11 // pred_check
          %p298 = pneg %p214
        $region42: #{tpu_custom_call.1} parent=11 // pred_check_branch
          %300 = sbr.rel (%p298) target = $region44
        $region43: #{tpu_custom_call.1} parent=11 // pred_region
          _
        $region44: #{tpu_custom_call.1} parent=11 // pred_fallthru
          _
      $region12: #{tpu_custom_call.1} parent=5 // pred_fallthru
        _
      %p301 = scmp.lt.s32.totalorder %s20, 4
      // Predicated region
      $region45: #{tpu_custom_call.1} parent=5 // pred_check
        %p302 = pneg %p301
      $region46: #{tpu_custom_call.1} parent=5 // pred_check_branch
        %304 = sbr.rel (%p302) target = $region48
      $region47: #{tpu_custom_call.1} parent=5 // pred_region
        // Predicated region
        $region49: #{tpu_custom_call.1} parent=47 // pred_check
          %p305 = pneg %p40
        $region50: #{tpu_custom_call.1} parent=47 // pred_check_branch
          %307 = sbr.rel (%p305) target = $region52
        $region51: #{tpu_custom_call.1} parent=47 // pred_region
          %s308 = smul.u32 2, %s20
          %p309 = scmp.lt.s32.totalorder %s308, 7
          %s310 = scalar_select %p309, %s308, 7
          %s311 = smul.addr %s310, 8
          %s312 = scalar_lea.vmem %s0, %s311
          %s313 = smul.u32 2, %s20
        $region52: #{tpu_custom_call.1} parent=47 // pred_fallthru
          _
      $region48: #{tpu_custom_call.1} parent=5 // pred_fallthru
        _
      %p314 = scmp.le.s32.totalorder 1, %s20
      %p315 = scmp.lt.s32.totalorder %s20, 5
      %p316 = pnand %p314, %p315
      %p317 = pneg %p316
      // Predicated region
      $region53: #{tpu_custom_call.1} parent=5 // pred_check
        _
      $region54: #{tpu_custom_call.1} parent=5 // pred_check_branch
        %319 = sbr.rel (%p316) target = $region56
      $region55: #{tpu_custom_call.1} parent=5 // pred_region
        %s320 = ssub.s32 %s20, 1
        // Predicated region
        $region57: #{tpu_custom_call.1} parent=55 // pred_check
          %p321 = pneg %p151
        $region58: #{tpu_custom_call.1} parent=55 // pred_check_branch
          %323 = sbr.rel (%p321) target = $region60
        $region59: #{tpu_custom_call.1} parent=55 // pred_region
          %325 = dma.done [#allocation3], 1024
        $region60: #{tpu_custom_call.1} parent=55 // pred_fallthru
          _
        // Predicated region
        $region61: #{tpu_custom_call.1} parent=55 // pred_check
          %p326 = pneg %p193
        $region62: #{tpu_custom_call.1} parent=55 // pred_check_branch
          %328 = sbr.rel (%p326) target = $region64
        $region63: #{tpu_custom_call.1} parent=55 // pred_region
          %330 = dma.done [#allocation6], 1024
        $region64: #{tpu_custom_call.1} parent=55 // pred_fallthru
          _
        %s331 = smul.u32 2, %s25
        %p332 = scmp.lt.s32.totalorder %s331, 7
        %s333 = scalar_select %p332, %s331, 7
        %s334 = smul.addr %s333, 8
        %s335 = scalar_lea.vmem %s0, %s334
        %p336 = pneg %p46
        %p337 = pneg %p43
        %p338 = pneg %p67
        %p339 = pneg %p64
        %p340 = pneg %p88
        %p341 = pneg %p85
        %p342 = pneg %p109
        %p343 = pneg %p106
        %p344 = pneg %p130
        %p345 = pneg %p127
        %p346 = pneg %p151
        %p347 = pneg %p148
        %p348 = pneg %p172
        %p349 = pneg %p169
        %p350 = pneg %p193
        %p351 = pneg %p190
        %p352 = pneg %p214
        %p353 = pneg %p211
        %p354 = pneg %p240
        %p355 = pneg %p237
        %s356 = sand.u32 %s227, 1
        %s357 = scalar_lea.sflag [#allocation4], %s356
        %s358 = sand.u32 %s227, 1
        %s359 = smul.addr %s358, 16
        %s360 = scalar_lea.vmem [#allocation7], %s359
        %s361 = smul.u32 2, %s25
        %p362 = scmp.lt.s32.totalorder %s361, 7
        %s363 = scalar_select %p362, %s361, 7
        %s364 = smul.addr %s363, 8
        %s365 = scalar_lea.vmem %s0, %s364
        %s366 = smul.u32 2, %s25
        %s367 = smul.u32 2, %s25
        %v369 = vld [vmem:[%s365] sm:$0xff]
        %v370 = vld [vmem:[%s365 + $0x8] sm:$0xff]
        %v371 = vpack.c.bf16 %v370, %v369
        %v372 = vld [vmem:[%s1] sm:$0xf]
        %v373 = vld [vmem:[%s1 + $0x4] sm:$0xf]
        %v374 = vld [vmem:[%s2] sm:$0x1]
        %v376 = vperm.slane %v374, 0
        %v380 = vunpack.c.l.b16 %v372
        %v381 = vunpack.c.l.b16 %v373
        %v382 = vpack.c.b16 %v381, %v380
        %vm384 = vcmask 130048
        %v386 = vsel %vm384, %v371, 0
        %388 = vmatpush.bf16.msra.mxu0 0
        %389 = vmatpush.bf16.msra.mxu0 0
        %390 = vmatpush.bf16.msra.mxu0 0
        %391 = vmatpush.bf16.msra.mxu0 0
        %392 = vmatpush.bf16.msra.mxu0 0
        %393 = vmatpush.bf16.msra.mxu0 0
        %394 = vmatpush.bf16.msra.mxu0 0
        %395 = vmatpush.bf16.msra.mxu0 %v382
        %396 = vmatmul.bf16.gmra.mxu0 %v386
        %v397 = vpop.f32.mrf.mxu0
        %v398 = vadd.f32 %v376, %v397
        %v399 = vpop.f32.mrf.mxu0
        %v400 = vadd.f32 %v376, %v399
        %401 = vdwg.mxu0
        %v402 = vmax.f32 %v398, 0.0
        %v403 = vmax.f32 %v400, 0.0
        %v404 = vpack.c.bf16 %v403, %v402
        %v405 = vld [vmem:[%s3] sm:$0xf]
        %v406 = vld [vmem:[%s3 + $0x4] sm:$0xf]
        %v407 = vld [vmem:[%s3 + $0x8] sm:$0xf]
        %v408 = vld [vmem:[%s3 + $0xc] sm:$0xf]
        %v409 = vld [vmem:[%s3 + $0x10] sm:$0xf]
        %v410 = vld [vmem:[%s3 + $0x14] sm:$0xf]
        %v411 = vld [vmem:[%s3 + $0x18] sm:$0xf]
        %v412 = vld [vmem:[%s3 + $0x1c] sm:$0xf]
        %v413 = vld [vmem:[%s3 + $0x20] sm:$0xf]
        %v414 = vld [vmem:[%s3 + $0x24] sm:$0xf]
        %v415 = vld [vmem:[%s3 + $0x28] sm:$0xf]
        %v416 = vld [vmem:[%s3 + $0x2c] sm:$0xf]
        %v417 = vld [vmem:[%s3 + $0x30] sm:$0xf]
        %v418 = vld [vmem:[%s3 + $0x34] sm:$0xf]
        %v419 = vld [vmem:[%s3 + $0x38] sm:$0xf]
        %v420 = vld [vmem:[%s3 + $0x3c] sm:$0xf]
        %v421 = vld [vmem:[%s4] sm:$0x1]
        %v423 = vperm.slane %v421, 0
        %v441 = vunpack.c.l.b16 %v405
        %v442 = vunpack.c.l.b16 %v406
        %v443 = vunpack.c.l.b16 %v407
        %v444 = vunpack.c.l.b16 %v408
        %v445 = vunpack.c.l.b16 %v409
        %v446 = vunpack.c.l.b16 %v410
        %v447 = vunpack.c.l.b16 %v411
        %v448 = vunpack.c.l.b16 %v412
        %v449 = vunpack.c.l.b16 %v413
        %v450 = vunpack.c.l.b16 %v414
        %v451 = vunpack.c.l.b16 %v415
        %v452 = vunpack.c.l.b16 %v416
        %v453 = vunpack.c.l.b16 %v417
        %v454 = vunpack.c.l.b16 %v418
        %v455 = vunpack.c.l.b16 %v419
        %v456 = vunpack.c.l.b16 %v420
        %v457 = vpack.c.b16 %v442, %v441
        %v458 = vpack.c.b16 %v444, %v443
        %v459 = vpack.c.b16 %v446, %v445
        %v460 = vpack.c.b16 %v448, %v447
        %v461 = vpack.c.b16 %v450, %v449
        %v462 = vpack.c.b16 %v452, %v451
        %v463 = vpack.c.b16 %v454, %v453
        %v464 = vpack.c.b16 %v456, %v455
        %473 = vmatpush.bf16.msra.mxu0 %v464
        %474 = vmatpush.bf16.msra.mxu0 %v463
        %475 = vmatpush.bf16.msra.mxu0 %v462
        %476 = vmatpush.bf16.msra.mxu0 %v461
        %477 = vmatpush.bf16.msra.mxu0 %v460
        %478 = vmatpush.bf16.msra.mxu0 %v459
        %479 = vmatpush.bf16.msra.mxu0 %v458
        %480 = vmatpush.bf16.msra.mxu0 %v457
        %481 = vmatmul.bf16.gmra.mxu0 %v404
        %v482 = vpop.f32.mrf.mxu0
        %v483 = vadd.f32 %v423, %v482
        %v484 = vpop.f32.mrf.mxu0
        %v485 = vadd.f32 %v423, %v484
        %486 = vdwg.mxu0
        %v487 = vmax.f32 %v483, 0.0
        %v488 = vmax.f32 %v485, 0.0
        %v489 = vpack.c.bf16 %v488, %v487
        %v490 = vld [vmem:[#allocation2] sm:$0xf]
        %v491 = vld [vmem:[#allocation2 + $0x4] sm:$0xf]
        %v492 = vld [vmem:[#allocation2 + $0x8] sm:$0xf]
        %v493 = vld [vmem:[#allocation2 + $0xc] sm:$0xf]
        %v494 = vld [vmem:[#allocation2 + $0x10] sm:$0xf]
        %v495 = vld [vmem:[#allocation2 + $0x14] sm:$0xf]
        %v496 = vld [vmem:[#allocation2 + $0x18] sm:$0xf]
        %v497 = vld [vmem:[#allocation2 + $0x1c] sm:$0xf]
        %v498 = vld [vmem:[#allocation2 + $0x20] sm:$0xf]
        %v499 = vld [vmem:[#allocation2 + $0x24] sm:$0xf]
        %v500 = vld [vmem:[#allocation2 + $0x28] sm:$0xf]
        %v501 = vld [vmem:[#allocation2 + $0x2c] sm:$0xf]
        %v502 = vld [vmem:[#allocation2 + $0x30] sm:$0xf]
        %v503 = vld [vmem:[#allocation2 + $0x34] sm:$0xf]
        %v504 = vld [vmem:[#allocation2 + $0x38] sm:$0xf]
        %v505 = vld [vmem:[#allocation2 + $0x3c] sm:$0xf]
        %v506 = vld [vmem:[%s6] sm:$0x1]
        %v508 = vperm.slane %v506, 0
        %v526 = vunpack.c.l.b16 %v490
        %v527 = vunpack.c.l.b16 %v491
        %v528 = vunpack.c.l.b16 %v492
        %v529 = vunpack.c.l.b16 %v493
        %v530 = vunpack.c.l.b16 %v494
        %v531 = vunpack.c.l.b16 %v495
        %v532 = vunpack.c.l.b16 %v496
        %v533 = vunpack.c.l.b16 %v497
        %v534 = vunpack.c.l.b16 %v498
        %v535 = vunpack.c.l.b16 %v499
        %v536 = vunpack.c.l.b16 %v500
        %v537 = vunpack.c.l.b16 %v501
        %v538 = vunpack.c.l.b16 %v502
        %v539 = vunpack.c.l.b16 %v503
        %v540 = vunpack.c.l.b16 %v504
        %v541 = vunpack.c.l.b16 %v505
        %v542 = vpack.c.b16 %v527, %v526
        %v543 = vpack.c.b16 %v529, %v528
        %v544 = vpack.c.b16 %v531, %v530
        %v545 = vpack.c.b16 %v533, %v532
        %v546 = vpack.c.b16 %v535, %v534
        %v547 = vpack.c.b16 %v537, %v536
        %v548 = vpack.c.b16 %v539, %v538
        %v549 = vpack.c.b16 %v541, %v540
        %558 = vmatpush.bf16.msra.mxu0 %v549
        %559 = vmatpush.bf16.msra.mxu0 %v548
        %560 = vmatpush.bf16.msra.mxu0 %v547
        %561 = vmatpush.bf16.msra.mxu0 %v546
        %562 = vmatpush.bf16.msra.mxu0 %v545
        %563 = vmatpush.bf16.msra.mxu0 %v544
        %564 = vmatpush.bf16.msra.mxu0 %v543
        %565 = vmatpush.bf16.msra.mxu0 %v542
        %566 = vmatmul.bf16.gmra.mxu0 %v489
        %v567 = vpop.f32.mrf.mxu0
        %v568 = vadd.f32 %v508, %v567
        %v569 = vpop.f32.mrf.mxu0
        %v570 = vadd.f32 %v508, %v569
        %571 = vdwg.mxu0
        %v572 = vmax.f32 %v568, 0.0
        %v573 = vmax.f32 %v570, 0.0
        %v574 = vpack.c.bf16 %v573, %v572
        %v575 = vld [vmem:[#allocation5] sm:$0xf]
        %v576 = vld [vmem:[#allocation5 + $0x4] sm:$0xf]
        %v577 = vld [vmem:[#allocation5 + $0x8] sm:$0xf]
        %v578 = vld [vmem:[#allocation5 + $0xc] sm:$0xf]
        %v579 = vld [vmem:[#allocation5 + $0x10] sm:$0xf]
        %v580 = vld [vmem:[#allocation5 + $0x14] sm:$0xf]
        %v581 = vld [vmem:[#allocation5 + $0x18] sm:$0xf]
        %v582 = vld [vmem:[#allocation5 + $0x1c] sm:$0xf]
        %v583 = vld [vmem:[#allocation5 + $0x20] sm:$0xf]
        %v584 = vld [vmem:[#allocation5 + $0x24] sm:$0xf]
        %v585 = vld [vmem:[#allocation5 + $0x28] sm:$0xf]
        %v586 = vld [vmem:[#allocation5 + $0x2c] sm:$0xf]
        %v587 = vld [vmem:[#allocation5 + $0x30] sm:$0xf]
        %v588 = vld [vmem:[#allocation5 + $0x34] sm:$0xf]
        %v589 = vld [vmem:[#allocation5 + $0x38] sm:$0xf]
        %v590 = vld [vmem:[#allocation5 + $0x3c] sm:$0xf]
        %v591 = vld [vmem:[%s8] sm:$0x1]
        %v593 = vperm.slane %v591, 0
        %v611 = vunpack.c.l.b16 %v575
        %v612 = vunpack.c.l.b16 %v576
        %v613 = vunpack.c.l.b16 %v577
        %v614 = vunpack.c.l.b16 %v578
        %v615 = vunpack.c.l.b16 %v579
        %v616 = vunpack.c.l.b16 %v580
        %v617 = vunpack.c.l.b16 %v581
        %v618 = vunpack.c.l.b16 %v582
        %v619 = vunpack.c.l.b16 %v583
        %v620 = vunpack.c.l.b16 %v584
        %v621 = vunpack.c.l.b16 %v585
        %v622 = vunpack.c.l.b16 %v586
        %v623 = vunpack.c.l.b16 %v587
        %v624 = vunpack.c.l.b16 %v588
        %v625 = vunpack.c.l.b16 %v589
        %v626 = vunpack.c.l.b16 %v590
        %v627 = vpack.c.b16 %v612, %v611
        %v628 = vpack.c.b16 %v614, %v613
        %v629 = vpack.c.b16 %v616, %v615
        %v630 = vpack.c.b16 %v618, %v617
        %v631 = vpack.c.b16 %v620, %v619
        %v632 = vpack.c.b16 %v622, %v621
        %v633 = vpack.c.b16 %v624, %v623
        %v634 = vpack.c.b16 %v626, %v625
        %643 = vmatpush.bf16.msra.mxu0 %v634
        %644 = vmatpush.bf16.msra.mxu0 %v633
        %645 = vmatpush.bf16.msra.mxu0 %v632
        %646 = vmatpush.bf16.msra.mxu0 %v631
        %647 = vmatpush.bf16.msra.mxu0 %v630
        %648 = vmatpush.bf16.msra.mxu0 %v629
        %649 = vmatpush.bf16.msra.mxu0 %v628
        %650 = vmatpush.bf16.msra.mxu0 %v627
        %651 = vmatmul.bf16.gmra.mxu0 %v574
        %v652 = vpop.f32.mrf.mxu0
        %v653 = vadd.f32 %v593, %v652
        %v654 = vpop.f32.mrf.mxu0
        %v655 = vadd.f32 %v593, %v654
        %656 = vdwg.mxu0
        %657 = vst [vmem:[%s360] sm:$0xff] %v653
        %658 = vst [vmem:[%s360 + $0x8] sm:$0xff] %v655
        %s659 = sand.u32 %s227, 1
        %s660 = scalar_lea.sflag [#allocation4], %s659
        %s661 = sand.u32 %s227, 1
        %s662 = smul.addr %s661, 16
        %s663 = scalar_lea.vmem [#allocation7], %s662
        // Predicated region
        $region65: #{tpu_custom_call.1} parent=55 // pred_check
          %p664 = pneg %p237
        $region66: #{tpu_custom_call.1} parent=55 // pred_check_branch
          %666 = sbr.rel (%p664) target = $region68
        $region67: #{tpu_custom_call.1} parent=55 // pred_region
          %s667 = smul.u32 2, %s25
          %669 = vsyncadd %s660, 0
          %s670 = smul.addr %s667, 8
          %s671 = scalar_lea.hbm %s9, %s670
          %s672 = sshll.u32 %s663, 4
          %s673 = int_to_ptr.vmem [resolvable:$true] %s672
          %s674 = sshll.u32 %s671, 4
          %s675 = int_to_ptr.hbm [resolvable:$true] %s674
          %680 = dma.vmem_to_hbm [thread:$0]  %s673, 256, %s675, %s660, 128, 128, 8
        $region68: #{tpu_custom_call.1} parent=55 // pred_fallthru
          _
      $region56: #{tpu_custom_call.1} parent=5 // pred_fallthru
        _
      %p681 = scmp.le.s32.totalorder 2, %s20
      // Predicated region
      $region69: #{tpu_custom_call.1} parent=5 // pred_check
        %p682 = pneg %p681
      $region70: #{tpu_custom_call.1} parent=5 // pred_check_branch
        %684 = sbr.rel (%p682) target = $region72
      $region71: #{tpu_custom_call.1} parent=5 // pred_region
        %s685 = ssub.s32 %s20, 2
        // Predicated region
        $region73: #{tpu_custom_call.1} parent=71 // pred_check
          %p686 = pneg %p243
        $region74: #{tpu_custom_call.1} parent=71 // pred_check_branch
          %688 = sbr.rel (%p686) target = $region76
        $region75: #{tpu_custom_call.1} parent=71 // pred_region
          %s689 = sand.u32 %s228, 1
          %s690 = scalar_lea.sflag [#allocation4], %s689
          %s691 = sand.u32 %s228, 1
          %s692 = smul.addr %s691, 16
          %s693 = scalar_lea.vmem [#allocation7], %s692
          %695 = dma.done %s690, 256
        $region76: #{tpu_custom_call.1} parent=71 // pred_fallthru
          _
      $region72: #{tpu_custom_call.1} parent=5 // pred_fallthru
        _
    $region6: #{tpu_custom_call.1} parent=1 // loop_footer
      %s24 = sadd.s32 1, %s20
    $region7: #{tpu_custom_call.1} parent=1 // loop_footer_branch
      %19 = sbr.rel target = $region3
    $region8: #{tpu_custom_call.1} parent=1 // loop_exit
      _
    %696 = vsyncpa [#allocation3], 1
    %s697 = scalar_lea.sflag [#allocation3], 1
    %698 = vsyncpa %s697, 1
    %699 = vsyncpa [#allocation6], 1
    %700 = vsyncpa [#allocation4], 1
    %s701 = scalar_lea.sflag [#allocation4], 1
    %702 = vsyncpa %s701, 1

</llo_original>
